<compile_context>
chip_gen: v7x
topology: tpu7x:2x2x1
jax: 0.10.0
libtpu: 0.0.40
codegen_flags: <defaults>
</compile_context>

<pallas_src>
import functools

import jax
import jax.numpy as jnp
from jax.experimental import pallas as pl
from jax.experimental.pallas import tpu as pltpu


C_IN, C1, C2 = 4, 8, 16          # input channels, conv0 out, recurrent-cell out
HID, N_CLASSES = 64, 10          # classifier hidden width, replaced fc6 out


def _vmem():
    return pl.BlockSpec(memory_space=pltpu.MemorySpace.VMEM)


# ----------------------------- Pallas kernels ------------------------------


def _conv0_kernel(p_ref, w_ref, b_ref, o_ref):
    """conv layer 0 as one im2col GEMM (+bias+ReLU) over a block of frames.
    p:(M,9*Cin)  w:(9*Cin,C1)  b:(1,C1)  ->  o:(M,C1)."""
    y = jnp.dot(p_ref[...], w_ref[...], preferred_element_type=jnp.float32)
    o_ref[...] = jnp.maximum(y + b_ref[...], 0.0)


def _rcn_step_kernel(p_ref, wxh_ref, whh_ref, b_ref, h_out_ref, h_ref):
    """One 'vanilla' RCN time step; grid=(T,) 'arbitrary', h carried in VMEM.
       h_t = ReLU(im2col(y_t) @ Wxh + h_{t-1} @ Whh + b)."""
    t = pl.program_id(0)

    @pl.when(t == 0)
    def _init():                                   # h0 = None -> zeros
        h_ref[...] = jnp.zeros_like(h_ref)

    z = jnp.dot(p_ref[0], wxh_ref[...], preferred_element_type=jnp.float32)
    z = z + jnp.dot(h_ref[...], whh_ref[...], preferred_element_type=jnp.float32)
    h_new = jnp.maximum(z + b_ref[...], 0.0)       # (B*H2*W2, C2)
    h_ref[...] = h_new                             # carry to next grid step
    h_out_ref[0] = h_new                           # per-t output block


def _pool_avg_classifier_kernel(a_ref, b_ref, c_ref, d_ref,
                                w0_ref, b0_ref, w3_ref, b3_ref, w6_ref, b6_ref,
                                o_ref, *, only_last):
    """Fused epilogue: 2x2 max-pool (max of the 4 pre-sliced shifted views),
    mean over time, and the 3-layer classifier.  a..d: (T, B, F) in torch
    NCHW .view(B,-1) flatten order."""
    m = jnp.maximum(jnp.maximum(a_ref[...], b_ref[...]),
                    jnp.maximum(c_ref[...], d_ref[...]))      # (T, B, F)
    steps = m.shape[0]
    if only_last:                                             # output mode 'last'
        feat = m[steps - 1]
    else:                                                     # output mode 'average'
        feat = m[0]
        for t in range(1, steps):
            feat = feat + m[t]
        feat = feat * (1.0 / steps)
    f = jnp.dot(feat, w0_ref[...], preferred_element_type=jnp.float32) + b0_ref[...]
    f = jnp.maximum(f, 0.0)
    f = jnp.dot(f, w3_ref[...], preferred_element_type=jnp.float32) + b3_ref[...]
    f = jnp.maximum(f, 0.0)
    o_ref[...] = jnp.dot(f, w6_ref[...], preferred_element_type=jnp.float32) + b6_ref[...]


# ------------------------------- wrappers -----------------------------------


def _im2col_3x3(x):
    """(N,H,W,C) NHWC -> (N*H*W, 9*C) patches for a 3x3/stride-1/pad-1 conv.
    Pure layout glue (pad + shifted slices + concat), done once per forward."""
    n, h, w, c = x.shape
    xp = jnp.pad(x, ((0, 0), (1, 1), (1, 1), (0, 0)))
    taps = [xp[:, kh:kh + h, kw:kw + w, :] for kh in range(3) for kw in range(3)]
    return jnp.concatenate(taps, axis=-1).reshape(n * h * w, 9 * c)


def _maxpool2x2_nhwc(x):
    """2x2/stride-2 max pool as an elementwise max of 4 strided views (XLA)."""
    return jnp.maximum(
        jnp.maximum(x[:, 0::2, 0::2, :], x[:, 0::2, 1::2, :]),
        jnp.maximum(x[:, 1::2, 0::2, :], x[:, 1::2, 1::2, :]))


def conv0(patches, w, b):
    m, k = patches.shape
    c_out = w.shape[1]
    n_blocks = 2 if m % 16 == 0 else 1       # v7x: shard the GEMM across both TCs
    bm = m // n_blocks
    grid_spec = pltpu.PrefetchScalarGridSpec(
        num_scalar_prefetch=0,
        grid=(n_blocks,),
        in_specs=[
            pl.BlockSpec((bm, k), lambda i: (i, 0)),
            pl.BlockSpec((k, c_out), lambda i: (0, 0)),
            pl.BlockSpec((1, c_out), lambda i: (0, 0)),
        ],
        out_specs=pl.BlockSpec((bm, c_out), lambda i: (i, 0)),
    )
    return pl.pallas_call(
        _conv0_kernel,
        out_shape=jax.ShapeDtypeStruct((m, c_out), jnp.float32),
        grid_spec=grid_spec,
        compiler_params=pltpu.CompilerParams(dimension_semantics=("parallel",)),
    )(patches, w, b)


def rcn_recurrence(p_seq, wxh, whh, b):
    t_steps, m, k = p_seq.shape
    c2 = whh.shape[0]
    grid_spec = pltpu.PrefetchScalarGridSpec(
        num_scalar_prefetch=0,
        grid=(t_steps,),
        in_specs=[
            pl.BlockSpec((1, m, k), lambda t: (t, 0, 0)),
            pl.BlockSpec((k, c2), lambda t: (0, 0)),     # resident across steps
            pl.BlockSpec((c2, c2), lambda t: (0, 0)),
            pl.BlockSpec((1, c2), lambda t: (0, 0)),
        ],
        out_specs=pl.BlockSpec((1, m, c2), lambda t: (t, 0, 0)),
        scratch_shapes=[pltpu.VMEM((m, c2), jnp.float32)],   # h_{t-1}
    )
    return pl.pallas_call(
        _rcn_step_kernel,
        out_shape=jax.ShapeDtypeStruct((t_steps, m, c2), jnp.float32),
        grid_spec=grid_spec,
        compiler_params=pltpu.CompilerParams(dimension_semantics=("arbitrary",)),
    )(p_seq, wxh, whh, b)


def pool_avg_classifier(views, w0, b0, w3, b3, w6, b6, only_last):
    batch = views[0].shape[1]
    n_cls = w6.shape[1]
    kern = functools.partial(_pool_avg_classifier_kernel, only_last=only_last)
    return pl.pallas_call(
        kern,
        out_shape=jax.ShapeDtypeStruct((batch, n_cls), jnp.float32),
        in_specs=[_vmem()] * 10,
        out_specs=_vmem(),
    )(*views, w0, b0, w3, b3, w6, b6)


# ------------------------------ model setup ---------------------------------


def init_params(key):
    ks = jax.random.split(key, 12)
    s = 0.1
    flat_in = C2 * 4 * 4          # 16 channels * (16/2/2)^2 spatial
    return {
        # VGG features conv #0 (kept as plain Conv2d + ReLU)
        "conv0_w": s * jax.random.normal(ks[0], (3, 3, C_IN, C1), jnp.float32),
        "conv0_b": s * jax.random.normal(ks[1], (C1,), jnp.float32),
        # conv #1 replaced by 'vanilla' RCN cell
        "cell_wxh": s * jax.random.normal(ks[2], (3, 3, C1, C2), jnp.float32),
        "cell_bxh": s * jax.random.normal(ks[3], (C2,), jnp.float32),
        "cell_whh": s * jax.random.normal(ks[4], (C2, C2), jnp.float32),
        # VGG classifier (module '6' replaced -> N_CLASSES outputs)
        "fc0_w": s * jax.random.normal(ks[5], (flat_in, HID), jnp.float32),
        "fc0_b": s * jax.random.normal(ks[6], (HID,), jnp.float32),
        "fc3_w": s * jax.random.normal(ks[7], (HID, HID), jnp.float32),
        "fc3_b": s * jax.random.normal(ks[8], (HID,), jnp.float32),
        "fc6_w": s * jax.random.normal(ks[9], (HID, N_CLASSES), jnp.float32),
        "fc6_b": s * jax.random.normal(ks[10], (N_CLASSES,), jnp.float32),
    }


def vgg_gru_forward(params, x, only_last=False):
    """x: (T, B, C, H, W) float32 (NCHW frames, time-major)."""
    t_steps, batch, c_in, h, w = x.shape
    h2, w2 = h // 2, w // 2

    # layout glue: NCHW -> NHWC, all frames batched together
    xs = jnp.transpose(x, (0, 1, 3, 4, 2)).reshape(t_steps * batch, h, w, c_in)

    # --- stage 1: conv0(+ReLU) for all T*B frames as ONE im2col GEMM --------
    p0 = _im2col_3x3(xs)                                       # (T*B*H*W, 9*Cin)
    y = conv0(p0, params["conv0_w"].reshape(9 * c_in, C1),
              params["conv0_b"].reshape(1, C1))                # (T*B*H*W, C1)
    y = y.reshape(t_steps * batch, h, w, C1)

    # maxpool #1 + im2col for the cell (still time-independent -> hoisted)
    y = _maxpool2x2_nhwc(y)                                    # (T*B, H/2, W/2, C1)
    p1 = _im2col_3x3(y).reshape(t_steps, batch * h2 * w2, 9 * C1)

    # --- stage 2: fused recurrence over time (one pallas_call, grid=(T,)) ---
    h_all = rcn_recurrence(p1, params["cell_wxh"].reshape(9 * C1, C2),
                           params["cell_whh"],
                           params["cell_bxh"].reshape(1, C2))  # (T, B*H2*W2, C2)

    # --- stage 3: maxpool #2 + time-average + classifier, fused -------------
    # Pre-slice the 4 shifted pool views and flatten in torch NCHW .view(B,-1)
    # order (layout glue); max / mean / the 3 GEMMs run inside one kernel.
    h_nchw = jnp.transpose(h_all.reshape(t_steps, batch, h2, w2, C2),
                           (0, 1, 4, 2, 3))                    # (T, B, C2, H2, W2)
    f_dim = C2 * (h2 // 2) * (w2 // 2)
    views = [h_nchw[:, :, :, i::2, j::2].reshape(t_steps, batch, f_dim)
             for i in (0, 1) for j in (0, 1)]

    # classifier (Dropout is identity at inference / self.dropout is None)
    return pool_avg_classifier(
        views, params["fc0_w"], params["fc0_b"].reshape(1, HID),
        params["fc3_w"], params["fc3_b"].reshape(1, HID),
        params["fc6_w"], params["fc6_b"].reshape(1, N_CLASSES),
        only_last)


if __name__ == "__main__":
    key = jax.random.PRNGKey(0)
    k_par, k_x = jax.random.split(key)
    params = init_params(k_par)

    T, B, H, W = 4, 2, 16, 16
    x = jax.random.normal(k_x, (T, B, C_IN, H, W), jnp.float32)

    out = jax.jit(vgg_gru_forward)(params, x)
    out = jax.block_until_ready(out)

    assert out.shape == (B, N_CLASSES), out.shape
    assert jnp.all(jnp.isfinite(out))
    print("KERNEL_OK")
</pallas_src>

<mosaic_0001>
module attributes {stable_mosaic.version = 11 : i64} {
  func.func @_conv0_kernel(%arg0: i32, %arg1: memref<1024x36xf32, #tpu.memory_space<vmem>>, %arg2: memref<36x8xf32, #tpu.memory_space<vmem>>, %arg3: memref<1x8xf32, #tpu.memory_space<vmem>>, %arg4: memref<1024x8xf32, #tpu.memory_space<vmem>>) attributes {dimension_semantics = [#tpu.dimension_semantics<parallel>], iteration_bounds = array<i64: 2>, scalar_prefetch = 0 : i64, scratch_operands = 0 : i64, tpu.core_type = #tpu.core_type<tc>, window_params = [{transform_indices = @transform_0, window_bounds = array<i64: 1024, 36>}, {pipeline_mode = #tpu.pipeline_mode<synchronous>, transform_indices = @transform_1, window_bounds = array<i64: 36, 8>}, {pipeline_mode = #tpu.pipeline_mode<synchronous>, transform_indices = @transform_2, window_bounds = array<i64: 1, 8>}, {transform_indices = @transform_3, window_bounds = array<i64: 1024, 8>}]} {
    %c0 = arith.constant 0 : index
    %c0_0 = arith.constant 0 : index
    %0 = vector.load %arg1[%c0, %c0_0] : memref<1024x36xf32, #tpu.memory_space<vmem>>, vector<1024x36xf32>
    %c0_1 = arith.constant 0 : index
    %c0_2 = arith.constant 0 : index
    %1 = vector.load %arg2[%c0_1, %c0_2] : memref<36x8xf32, #tpu.memory_space<vmem>>, vector<36x8xf32>
    %cst = arith.constant dense<0.000000e+00> : vector<1024x8xf32>
    %2 = tpu.matmul %0, %1, %cst {dimension_numbers = #tpu.dot_dimension_numbers<[1], [0], [0], [1], [0, 0, 1, 1], [], []>} : vector<1024x36xf32>, vector<36x8xf32>, vector<1024x8xf32> -> vector<1024x8xf32>
    %c0_3 = arith.constant 0 : index
    %c0_4 = arith.constant 0 : index
    %3 = vector.load %arg3[%c0_3, %c0_4] : memref<1x8xf32, #tpu.memory_space<vmem>>, vector<1x8xf32>
    %4 = vector.broadcast %3 : vector<1x8xf32> to vector<1024x8xf32>
    %5 = arith.addf %2, %4 : vector<1024x8xf32>
    %cst_5 = arith.constant 0.000000e+00 : f32
    %6 = vector.broadcast %cst_5 : f32 to vector<1024x8xf32>
    %7 = arith.maximumf %5, %6 : vector<1024x8xf32>
    %c0_6 = arith.constant 0 : index
    %c0_7 = arith.constant 0 : index
    %8 = vector.load %arg4[%c0_6, %c0_7] : memref<1024x8xf32, #tpu.memory_space<vmem>>, vector<1024x8xf32>
    tpu.vector_store %arg4[%c0_6, %c0_7], %7 {strides = array<i32>} : memref<1024x8xf32, #tpu.memory_space<vmem>>, vector<1024x8xf32>,
    return
  }
  func.func @transform_0(%arg0: i32) -> (i32, i32) {
    %c0_i32 = arith.constant 0 : i32
    %c0_i32_0 = arith.constant 0 : i32
    return %arg0, %c0_i32 : i32, i32
  }
  func.func @transform_1(%arg0: i32) -> (i32, i32) {
    %c0_i32 = arith.constant 0 : i32
    %c0_i32_0 = arith.constant 0 : i32
    %c0_i32_1 = arith.constant 0 : i32
    return %c0_i32, %c0_i32_0 : i32, i32
  }
  func.func @transform_2(%arg0: i32) -> (i32, i32) {
    %c0_i32 = arith.constant 0 : i32
    %c0_i32_0 = arith.constant 0 : i32
    %c0_i32_1 = arith.constant 0 : i32
    return %c0_i32, %c0_i32_0 : i32, i32
  }
  func.func @transform_3(%arg0: i32) -> (i32, i32) {
    %c0_i32 = arith.constant 0 : i32
    %c0_i32_0 = arith.constant 0 : i32
    return %arg0, %c0_i32 : i32, i32
  }
}

module attributes {stable_mosaic.version = 11 : i64} {
  func.func @_rcn_step_kernel(%arg0: i32, %arg1: memref<1x128x72xf32, #tpu.memory_space<vmem>>, %arg2: memref<72x16xf32, #tpu.memory_space<vmem>>, %arg3: memref<16x16xf32, #tpu.memory_space<vmem>>, %arg4: memref<1x16xf32, #tpu.memory_space<vmem>>, %arg5: memref<1x128x16xf32, #tpu.memory_space<vmem>>, %arg6: memref<128x16xf32, #tpu.memory_space<vmem>>) attributes {dimension_semantics = [#tpu.dimension_semantics<arbitrary>], iteration_bounds = array<i64: 4>, scalar_prefetch = 0 : i64, scratch_operands = 1 : i64, tpu.core_type = #tpu.core_type<tc>, window_params = [{transform_indices = @transform_0, window_bounds = array<i64: 1, 128, 72>}, {pipeline_mode = #tpu.pipeline_mode<synchronous>, transform_indices = @transform_1, window_bounds = array<i64: 72, 16>}, {pipeline_mode = #tpu.pipeline_mode<synchronous>, transform_indices = @transform_2, window_bounds = array<i64: 16, 16>}, {pipeline_mode = #tpu.pipeline_mode<synchronous>, transform_indices = @transform_3, window_bounds = array<i64: 1, 16>}, {transform_indices = @transform_4, window_bounds = array<i64: 1, 128, 16>}]} {
    %c0_i32 = arith.constant 0 : i32
    %0 = arith.cmpi eq, %arg0, %c0_i32 : i32
    %1 = arith.extui %0 : i1 to i32
    %c0_i32_0 = arith.constant 0 : i32
    %2 = arith.cmpi ne, %1, %c0_i32_0 : i32
    scf.if %2 {
      %cst_18 = arith.constant 0.000000e+00 : f32
      %20 = vector.broadcast %cst_18 : f32 to vector<128x16xf32>
      %c0_19 = arith.constant 0 : index
      %c0_20 = arith.constant 0 : index
      %21 = vector.load %arg6[%c0_19, %c0_20] : memref<128x16xf32, #tpu.memory_space<vmem>>, vector<128x16xf32>
      tpu.vector_store %arg6[%c0_19, %c0_20], %20 {strides = array<i32>} : memref<128x16xf32, #tpu.memory_space<vmem>>, vector<128x16xf32>,
    } else {
    }
    %c0 = arith.constant 0 : index
    %c0_1 = arith.constant 0 : index
    %c0_2 = arith.constant 0 : index
    %3 = vector.load %arg1[%c0, %c0_1, %c0_2] : memref<1x128x72xf32, #tpu.memory_space<vmem>>, vector<1x128x72xf32>
    %4 = vector.shape_cast %3 : vector<1x128x72xf32> to vector<128x72xf32>
    %c0_3 = arith.constant 0 : index
    %c0_4 = arith.constant 0 : index
    %5 = vector.load %arg2[%c0_3, %c0_4] : memref<72x16xf32, #tpu.memory_space<vmem>>, vector<72x16xf32>
    %cst = arith.constant dense<0.000000e+00> : vector<128x16xf32>
    %6 = tpu.matmul %4, %5, %cst {dimension_numbers = #tpu.dot_dimension_numbers<[1], [0], [0], [1], [0, 0, 1, 1], [], []>} : vector<128x72xf32>, vector<72x16xf32>, vector<128x16xf32> -> vector<128x16xf32>
    %c0_5 = arith.constant 0 : index
    %c0_6 = arith.constant 0 : index
    %7 = vector.load %arg6[%c0_5, %c0_6] : memref<128x16xf32, #tpu.memory_space<vmem>>, vector<128x16xf32>
    %c0_7 = arith.constant 0 : index
    %c0_8 = arith.constant 0 : index
    %8 = vector.load %arg3[%c0_7, %c0_8] : memref<16x16xf32, #tpu.memory_space<vmem>>, vector<16x16xf32>
    %cst_9 = arith.constant dense<0.000000e+00> : vector<128x16xf32>
    %9 = tpu.matmul %7, %8, %cst_9 {dimension_numbers = #tpu.dot_dimension_numbers<[1], [0], [0], [1], [0, 0, 1, 1], [], []>} : vector<128x16xf32>, vector<16x16xf32>, vector<128x16xf32> -> vector<128x16xf32>
    %10 = arith.addf %6, %9 : vector<128x16xf32>
    %c0_10 = arith.constant 0 : index
    %c0_11 = arith.constant 0 : index
    %11 = vector.load %arg4[%c0_10, %c0_11] : memref<1x16xf32, #tpu.memory_space<vmem>>, vector<1x16xf32>
    %12 = vector.broadcast %11 : vector<1x16xf32> to vector<128x16xf32>
    %13 = arith.addf %10, %12 : vector<128x16xf32>
    %cst_12 = arith.constant 0.000000e+00 : f32
    %14 = vector.broadcast %cst_12 : f32 to vector<128x16xf32>
    %15 = arith.maximumf %13, %14 : vector<128x16xf32>
    %c0_13 = arith.constant 0 : index
    %c0_14 = arith.constant 0 : index
    %16 = vector.load %arg6[%c0_13, %c0_14] : memref<128x16xf32, #tpu.memory_space<vmem>>, vector<128x16xf32>
    tpu.vector_store %arg6[%c0_13, %c0_14], %15 {strides = array<i32>} : memref<128x16xf32, #tpu.memory_space<vmem>>, vector<128x16xf32>,
    %c0_15 = arith.constant 0 : index
    %c0_16 = arith.constant 0 : index
    %c0_17 = arith.constant 0 : index
    %17 = vector.load %arg5[%c0_15, %c0_16, %c0_17] : memref<1x128x16xf32, #tpu.memory_space<vmem>>, vector<1x128x16xf32>
    %18 = vector.shape_cast %17 : vector<1x128x16xf32> to vector<128x16xf32>
    %19 = vector.shape_cast %15 : vector<128x16xf32> to vector<1x128x16xf32>
    tpu.vector_store %arg5[%c0_15, %c0_16, %c0_17], %19 {strides = array<i32>} : memref<1x128x16xf32, #tpu.memory_space<vmem>>, vector<1x128x16xf32>,
    return
  }
  func.func @transform_0(%arg0: i32) -> (i32, i32, i32) {
    %c0_i32 = arith.constant 0 : i32
    %c0_i32_0 = arith.constant 0 : i32
    %c0_i32_1 = arith.constant 0 : i32
    return %arg0, %c0_i32, %c0_i32_0 : i32, i32, i32
  }
  func.func @transform_1(%arg0: i32) -> (i32, i32) {
    %c0_i32 = arith.constant 0 : i32
    %c0_i32_0 = arith.constant 0 : i32
    %c0_i32_1 = arith.constant 0 : i32
    return %c0_i32, %c0_i32_0 : i32, i32
  }
  func.func @transform_2(%arg0: i32) -> (i32, i32) {
    %c0_i32 = arith.constant 0 : i32
    %c0_i32_0 = arith.constant 0 : i32
    %c0_i32_1 = arith.constant 0 : i32
    return %c0_i32, %c0_i32_0 : i32, i32
  }
  func.func @transform_3(%arg0: i32) -> (i32, i32) {
    %c0_i32 = arith.constant 0 : i32
    %c0_i32_0 = arith.constant 0 : i32
    %c0_i32_1 = arith.constant 0 : i32
    return %c0_i32, %c0_i32_0 : i32, i32
  }
  func.func @transform_4(%arg0: i32) -> (i32, i32, i32) {
    %c0_i32 = arith.constant 0 : i32
    %c0_i32_0 = arith.constant 0 : i32
    %c0_i32_1 = arith.constant 0 : i32
    return %arg0, %c0_i32, %c0_i32_0 : i32, i32, i32
  }
}

module attributes {stable_mosaic.version = 11 : i64} {
  func.func @_pool_avg_classifier_kernel(%arg0: memref<4x2x256xf32, #tpu.memory_space<vmem>>, %arg1: memref<4x2x256xf32, #tpu.memory_space<vmem>>, %arg2: memref<4x2x256xf32, #tpu.memory_space<vmem>>, %arg3: memref<4x2x256xf32, #tpu.memory_space<vmem>>, %arg4: memref<256x64xf32, #tpu.memory_space<vmem>>, %arg5: memref<1x64xf32, #tpu.memory_space<vmem>>, %arg6: memref<64x64xf32, #tpu.memory_space<vmem>>, %arg7: memref<1x64xf32, #tpu.memory_space<vmem>>, %arg8: memref<64x10xf32, #tpu.memory_space<vmem>>, %arg9: memref<1x10xf32, #tpu.memory_space<vmem>>, %arg10: memref<2x10xf32, #tpu.memory_space<vmem>>) attributes {dimension_semantics = [], scalar_prefetch = 0 : i64, scratch_operands = 0 : i64, tpu.core_type = #tpu.core_type<tc>} {
    %c0 = arith.constant 0 : index
    %c0_0 = arith.constant 0 : index
    %c0_1 = arith.constant 0 : index
    %0 = vector.load %arg0[%c0, %c0_0, %c0_1] : memref<4x2x256xf32, #tpu.memory_space<vmem>>, vector<4x2x256xf32>
    %c0_2 = arith.constant 0 : index
    %c0_3 = arith.constant 0 : index
    %c0_4 = arith.constant 0 : index
    %1 = vector.load %arg1[%c0_2, %c0_3, %c0_4] : memref<4x2x256xf32, #tpu.memory_space<vmem>>, vector<4x2x256xf32>
    %2 = arith.maximumf %0, %1 : vector<4x2x256xf32>
    %c0_5 = arith.constant 0 : index
    %c0_6 = arith.constant 0 : index
    %c0_7 = arith.constant 0 : index
    %3 = vector.load %arg2[%c0_5, %c0_6, %c0_7] : memref<4x2x256xf32, #tpu.memory_space<vmem>>, vector<4x2x256xf32>
    %c0_8 = arith.constant 0 : index
    %c0_9 = arith.constant 0 : index
    %c0_10 = arith.constant 0 : index
    %4 = vector.load %arg3[%c0_8, %c0_9, %c0_10] : memref<4x2x256xf32, #tpu.memory_space<vmem>>, vector<4x2x256xf32>
    %5 = arith.maximumf %3, %4 : vector<4x2x256xf32>
    %6 = arith.maximumf %2, %5 : vector<4x2x256xf32>
    %7 = vector.extract_strided_slice %6 {offsets = [0, 0, 0], sizes = [1, 2, 256], strides = [1, 1, 1]} : vector<4x2x256xf32> to vector<1x2x256xf32>
    %8 = vector.shape_cast %7 : vector<1x2x256xf32> to vector<2x256xf32>
    %9 = vector.extract_strided_slice %6 {offsets = [1, 0, 0], sizes = [1, 2, 256], strides = [1, 1, 1]} : vector<4x2x256xf32> to vector<1x2x256xf32>
    %10 = vector.shape_cast %9 : vector<1x2x256xf32> to vector<2x256xf32>
    %11 = arith.addf %8, %10 : vector<2x256xf32>
    %12 = vector.extract_strided_slice %6 {offsets = [2, 0, 0], sizes = [1, 2, 256], strides = [1, 1, 1]} : vector<4x2x256xf32> to vector<1x2x256xf32>
    %13 = vector.shape_cast %12 : vector<1x2x256xf32> to vector<2x256xf32>
    %14 = arith.addf %11, %13 : vector<2x256xf32>
    %15 = vector.extract_strided_slice %6 {offsets = [3, 0, 0], sizes = [1, 2, 256], strides = [1, 1, 1]} : vector<4x2x256xf32> to vector<1x2x256xf32>
    %16 = vector.shape_cast %15 : vector<1x2x256xf32> to vector<2x256xf32>
    %17 = arith.addf %14, %16 : vector<2x256xf32>
    %cst = arith.constant 2.500000e-01 : f32
    %18 = vector.broadcast %cst : f32 to vector<2x256xf32>
    %19 = arith.mulf %17, %18 : vector<2x256xf32>
    %c0_11 = arith.constant 0 : index
    %c0_12 = arith.constant 0 : index
    %20 = vector.load %arg4[%c0_11, %c0_12] : memref<256x64xf32, #tpu.memory_space<vmem>>, vector<256x64xf32>
    %cst_13 = arith.constant dense<0.000000e+00> : vector<2x64xf32>
    %21 = tpu.matmul %19, %20, %cst_13 {dimension_numbers = #tpu.dot_dimension_numbers<[1], [0], [0], [1], [0, 0, 1, 1], [], []>} : vector<2x256xf32>, vector<256x64xf32>, vector<2x64xf32> -> vector<2x64xf32>
    %c0_14 = arith.constant 0 : index
    %c0_15 = arith.constant 0 : index
    %22 = vector.load %arg5[%c0_14, %c0_15] : memref<1x64xf32, #tpu.memory_space<vmem>>, vector<1x64xf32>
    %23 = vector.broadcast %22 : vector<1x64xf32> to vector<2x64xf32>
    %24 = arith.addf %21, %23 : vector<2x64xf32>
    %cst_16 = arith.constant 0.000000e+00 : f32
    %25 = vector.broadcast %cst_16 : f32 to vector<2x64xf32>
    %26 = arith.maximumf %24, %25 : vector<2x64xf32>
    %c0_17 = arith.constant 0 : index
    %c0_18 = arith.constant 0 : index
    %27 = vector.load %arg6[%c0_17, %c0_18] : memref<64x64xf32, #tpu.memory_space<vmem>>, vector<64x64xf32>
    %cst_19 = arith.constant dense<0.000000e+00> : vector<2x64xf32>
    %28 = tpu.matmul %26, %27, %cst_19 {dimension_numbers = #tpu.dot_dimension_numbers<[1], [0], [0], [1], [0, 0, 1, 1], [], []>} : vector<2x64xf32>, vector<64x64xf32>, vector<2x64xf32> -> vector<2x64xf32>
    %c0_20 = arith.constant 0 : index
    %c0_21 = arith.constant 0 : index
    %29 = vector.load %arg7[%c0_20, %c0_21] : memref<1x64xf32, #tpu.memory_space<vmem>>, vector<1x64xf32>
    %30 = vector.broadcast %29 : vector<1x64xf32> to vector<2x64xf32>
    %31 = arith.addf %28, %30 : vector<2x64xf32>
    %cst_22 = arith.constant 0.000000e+00 : f32
    %32 = vector.broadcast %cst_22 : f32 to vector<2x64xf32>
    %33 = arith.maximumf %31, %32 : vector<2x64xf32>
    %c0_23 = arith.constant 0 : index
    %c0_24 = arith.constant 0 : index
    %34 = vector.load %arg8[%c0_23, %c0_24] : memref<64x10xf32, #tpu.memory_space<vmem>>, vector<64x10xf32>
    %cst_25 = arith.constant dense<0.000000e+00> : vector<2x10xf32>
    %35 = tpu.matmul %33, %34, %cst_25 {dimension_numbers = #tpu.dot_dimension_numbers<[1], [0], [0], [1], [0, 0, 1, 1], [], []>} : vector<2x64xf32>, vector<64x10xf32>, vector<2x10xf32> -> vector<2x10xf32>
    %c0_26 = arith.constant 0 : index
    %c0_27 = arith.constant 0 : index
    %36 = vector.load %arg9[%c0_26, %c0_27] : memref<1x10xf32, #tpu.memory_space<vmem>>, vector<1x10xf32>
    %37 = vector.broadcast %36 : vector<1x10xf32> to vector<2x10xf32>
    %38 = arith.addf %35, %37 : vector<2x10xf32>
    %c0_28 = arith.constant 0 : index
    %c0_29 = arith.constant 0 : index
    %39 = vector.load %arg10[%c0_28, %c0_29] : memref<2x10xf32, #tpu.memory_space<vmem>>, vector<2x10xf32>
    tpu.vector_store %arg10[%c0_28, %c0_29], %38 {strides = array<i32>} : memref<2x10xf32, #tpu.memory_space<vmem>>, vector<2x10xf32>,
    return
  }
}

</mosaic_0001>

<llo_original>
// kernel: vgg_gru_forward.3
$region0: #{vgg_gru_forward.3}
  #allocation0 [shape = 'u32[]', space=smem, size = 0x4, offset = 0x4, fixed_abs, tag = 'smem constant byte address 0x4 - core index']
  #allocation1 [shape = 'u32[144,128]{1,0:T(1,128)}', space=vmem, size = 0x12000, scoped, tag = 'internal scratch']
  %s0 = inlined_call_operand.vmem [shape: f32[2048,36], index: 0, kind: input, shape index: {}]
  %s1 = inlined_call_operand.vmem [shape: f32[36,8], index: 1, kind: input, shape index: {}]
  %s2 = inlined_call_operand.vmem [shape: f32[1,8], index: 2, kind: input, shape index: {}]
  %s3 = inlined_call_operand.vmem [shape: f32[2048,8], index: 3, kind: output, shape index: {}]
  %s4 = sld [smem:[#allocation0]]
  $region45: #{vgg_gru_forward.3} parent=0
    _
  %s6 = ssub.s32 1, %s4
  %s7 = scalar_select 0, %s6, %s4
  loop: start=0, step=1, limit=4
  $region2: #{vgg_gru_forward.3} parent=0 // loop_pre_header
    _
  $region3: #{vgg_gru_forward.3} parent=0 // loop_header
    %s9 = sphi 0, %s13
    %p10 = scmp.ge.s32.totalorder %s9, 4
    %s19 = sphi 0, %s21
    %s22 = sphi 0, %s19
    %s23 = sphi 0, %s22
    %s39 = sphi 0, %s23
    %s43 = sphi 0, %s43
    %s45 = sphi 0, %s43
    %s46 = sphi 0, %s45
    %s60 = sphi 0, %s46
    %s64 = sphi 0, %s64
    %s66 = sphi 0, %s64
    %s67 = sphi 0, %s66
    %s81 = sphi 0, %s67
    %s87 = sphi 0, %s89
    %s90 = sphi 0, %s87
    %s91 = sphi 0, %s90
    %s107 = sphi 0, %s91
  $region4: #{vgg_gru_forward.3} parent=0 // loop_header_branch
    %12 = sbr.rel (%p10) target = $region8
  $region5: #{vgg_gru_forward.3} parent=0 // loop_body
    %s14 = ssub.s32 %s9, 1
    %s15 = ssub.s32 %s9, 2
    %s16 = sadd.s32 %s9, 1
    %s17 = ssub.s32 %s9, %s16
    %p18 = scmp.eq.s32.totalorder %s17, 0
    %s20 = sadd.s32 %s19, 1
    %s21 = scalar_select %p18, %s19, %s20
    %p24 = pneg %p18
    %p25 = scmp.eq.s32.totalorder %s9, 1
    %p26 = por %p24, %p25
    %p27 = scmp.ne.s32.totalorder %s19, %s22
    %p28 = scmp.eq.s32.totalorder %s9, 0
    %p29 = por %p27, %p28
    %p30 = scmp.ne.s32.totalorder %s19, %s22
    %p31 = scmp.eq.s32.totalorder %s14, 1
    %p32 = por %p30, %p31
    %p33 = scmp.ne.s32.totalorder %s22, %s23
    %p34 = scmp.eq.s32.totalorder %s14, 0
    %p35 = por %p33, %p34
    %p36 = scmp.ne.s32.totalorder %s22, %s23
    %p37 = scmp.eq.s32.totalorder %s15, 1
    %p38 = por %p36, %p37
    %p40 = scmp.ne.s32.totalorder %s23, %s39
    %p41 = scmp.eq.s32.totalorder %s15, 0
    %p42 = por %p40, %p41
    %s44 = sadd.s32 %s43, 1
    %p47 = scmp.eq.s32.totalorder %s9, 1
    %p48 = scmp.ne.s32.totalorder %s43, %s45
    %p49 = scmp.eq.s32.totalorder %s9, 0
    %p50 = por %p48, %p49
    %p51 = scmp.ne.s32.totalorder %s43, %s45
    %p52 = scmp.eq.s32.totalorder %s14, 1
    %p53 = por %p51, %p52
    %p54 = scmp.ne.s32.totalorder %s45, %s46
    %p55 = scmp.eq.s32.totalorder %s14, 0
    %p56 = por %p54, %p55
    %p57 = scmp.ne.s32.totalorder %s45, %s46
    %p58 = scmp.eq.s32.totalorder %s15, 1
    %p59 = por %p57, %p58
    %p61 = scmp.ne.s32.totalorder %s46, %s60
    %p62 = scmp.eq.s32.totalorder %s15, 0
    %p63 = por %p61, %p62
    %s65 = sadd.s32 %s64, 1
    %p68 = scmp.eq.s32.totalorder %s9, 1
    %p69 = scmp.ne.s32.totalorder %s64, %s66
    %p70 = scmp.eq.s32.totalorder %s9, 0
    %p71 = por %p69, %p70
    %p72 = scmp.ne.s32.totalorder %s64, %s66
    %p73 = scmp.eq.s32.totalorder %s14, 1
    %p74 = por %p72, %p73
    %p75 = scmp.ne.s32.totalorder %s66, %s67
    %p76 = scmp.eq.s32.totalorder %s14, 0
    %p77 = por %p75, %p76
    %p78 = scmp.ne.s32.totalorder %s66, %s67
    %p79 = scmp.eq.s32.totalorder %s15, 1
    %p80 = por %p78, %p79
    %p82 = scmp.ne.s32.totalorder %s67, %s81
    %p83 = scmp.eq.s32.totalorder %s15, 0
    %p84 = por %p82, %p83
    %s85 = ssub.s32 %s9, %s16
    %p86 = scmp.eq.s32.totalorder %s85, 0
    %s88 = sadd.s32 %s87, 1
    %s89 = scalar_select %p86, %s87, %s88
    %p92 = pneg %p86
    %p93 = scmp.eq.s32.totalorder %s9, 1
    %p94 = por %p92, %p93
    %p95 = scmp.ne.s32.totalorder %s87, %s90
    %p96 = scmp.eq.s32.totalorder %s9, 0
    %p97 = por %p95, %p96
    %p98 = scmp.ne.s32.totalorder %s87, %s90
    %p99 = scmp.eq.s32.totalorder %s14, 1
    %p100 = por %p98, %p99
    %p101 = scmp.ne.s32.totalorder %s90, %s91
    %p102 = scmp.eq.s32.totalorder %s14, 0
    %p103 = por %p101, %p102
    %p104 = scmp.ne.s32.totalorder %s90, %s91
    %p105 = scmp.eq.s32.totalorder %s15, 1
    %p106 = por %p104, %p105
    %p108 = scmp.ne.s32.totalorder %s91, %s107
    %p109 = scmp.eq.s32.totalorder %s15, 0
    %p110 = por %p108, %p109
    %p111 = scmp.le.s32.totalorder 1, %s9
    %p112 = scmp.lt.s32.totalorder %s9, 3
    %p113 = pnand %p111, %p112
    %p114 = pneg %p113
    // Predicated region
    $region9: #{vgg_gru_forward.3} parent=5 // pred_check
      _
    $region10: #{vgg_gru_forward.3} parent=5 // pred_check_branch
      %116 = sbr.rel (%p113) target = $region12
    $region11: #{vgg_gru_forward.3} parent=5 // pred_region
      %s117 = ssub.s32 %s9, 1
      // Predicated region
      $region13: #{vgg_gru_forward.3} parent=11 // pred_check
        %p118 = pneg %p56
      $region14: #{vgg_gru_forward.3} parent=11 // pred_check_branch
        %120 = sbr.rel (%p118) target = $region16
      $region15: #{vgg_gru_forward.3} parent=11 // pred_region
        _
      $region16: #{vgg_gru_forward.3} parent=11 // pred_fallthru
        _
      // Predicated region
      $region17: #{vgg_gru_forward.3} parent=11 // pred_check
        %p121 = pneg %p77
      $region18: #{vgg_gru_forward.3} parent=11 // pred_check_branch
        %123 = sbr.rel (%p121) target = $region20
      $region19: #{vgg_gru_forward.3} parent=11 // pred_region
        _
      $region20: #{vgg_gru_forward.3} parent=11 // pred_fallthru
        _
    $region12: #{vgg_gru_forward.3} parent=5 // pred_fallthru
      _
    %p124 = scmp.lt.s32.totalorder %s9, 2
    // Predicated region
    $region21: #{vgg_gru_forward.3} parent=5 // pred_check
      %p125 = pneg %p124
    $region22: #{vgg_gru_forward.3} parent=5 // pred_check_branch
      %127 = sbr.rel (%p125) target = $region24
    $region23: #{vgg_gru_forward.3} parent=5 // pred_region
      // Predicated region
      $region25: #{vgg_gru_forward.3} parent=23 // pred_check
        %p128 = pneg %p29
      $region26: #{vgg_gru_forward.3} parent=23 // pred_check_branch
        %130 = sbr.rel (%p128) target = $region28
      $region27: #{vgg_gru_forward.3} parent=23 // pred_region
        %s131 = smul.u32 128, %s9
        %p132 = scmp.lt.s32.totalorder %s131, 255
        %s133 = scalar_select %p132, %s131, 255
        %s134 = smul.addr %s133, 8
        %s135 = scalar_lea.vmem %s0, %s134
        %s136 = smul.u32 128, %s9
      $region28: #{vgg_gru_forward.3} parent=23 // pred_fallthru
        _
    $region24: #{vgg_gru_forward.3} parent=5 // pred_fallthru
      _
    %p137 = scmp.le.s32.totalorder 1, %s9
    %p138 = scmp.lt.s32.totalorder %s9, 3
    %p139 = pnand %p137, %p138
    %p140 = pneg %p139
    // Predicated region
    $region29: #{vgg_gru_forward.3} parent=5 // pred_check
      _
    $region30: #{vgg_gru_forward.3} parent=5 // pred_check_branch
      %142 = sbr.rel (%p139) target = $region32
    $region31: #{vgg_gru_forward.3} parent=5 // pred_region
      %s143 = ssub.s32 %s9, 1
      %s144 = smul.u32 128, %s14
      %p145 = scmp.lt.s32.totalorder %s144, 255
      %s146 = scalar_select %p145, %s144, 255
      %s147 = smul.addr %s146, 8
      %s148 = scalar_lea.vmem %s0, %s147
      %p149 = pneg %p35
      %p150 = pneg %p32
      %p151 = pneg %p56
      %p152 = pneg %p53
      %p153 = pneg %p77
      %p154 = pneg %p74
      %p155 = pneg %p103
      %p156 = pneg %p100
      %s157 = smul.u32 128, %s14
      %p158 = scmp.lt.s32.totalorder %s157, 255
      %s159 = scalar_select %p158, %s157, 255
      %s160 = smul.addr %s159, 8
      %s161 = scalar_lea.vmem %s3, %s160
      %s162 = smul.u32 128, %s14
      %p163 = scmp.lt.s32.totalorder %s162, 255
      %s164 = scalar_select %p163, %s162, 255
      %s165 = smul.addr %s164, 8
      %s166 = scalar_lea.vmem %s0, %s165
      %s167 = smul.u32 128, %s14
      %s168 = smul.u32 128, %s14
      %p169 = scmp.lt.s32.totalorder %s168, 255
      %s170 = scalar_select %p169, %s168, 255
      %s171 = smul.addr %s170, 8
      %s172 = scalar_lea.vmem %s3, %s171
      %s173 = smul.u32 128, %s14
      %v174 = vld [vmem:[%s166] sm:$0xff]
      %v175 = vld [vmem:[%s166 + $0x8] sm:$0xff]
      %v176 = vld [vmem:[%s166 + $0x10] sm:$0xff]
      %v177 = vld [vmem:[%s166 + $0x18] sm:$0xff]
      %v178 = vld [vmem:[%s166 + $0x20] sm:$0xff]
      %v179 = vld [vmem:[%s166 + $0x28] sm:$0xff]
      %v180 = vld [vmem:[%s166 + $0x30] sm:$0xff]
      %v181 = vld [vmem:[%s166 + $0x38] sm:$0xff]
      %v182 = vld [vmem:[%s166 + $0x40] sm:$0xff]
      %v183 = vld [vmem:[%s166 + $0x48] sm:$0xff]
      %v184 = vld [vmem:[%s166 + $0x50] sm:$0xff]
      %v185 = vld [vmem:[%s166 + $0x58] sm:$0xff]
      %v186 = vld [vmem:[%s166 + $0x60] sm:$0xff]
      %v187 = vld [vmem:[%s166 + $0x68] sm:$0xff]
      %v188 = vld [vmem:[%s166 + $0x70] sm:$0xff]
      %v189 = vld [vmem:[%s166 + $0x78] sm:$0xff]
      %v190 = vld [vmem:[%s166 + $0x80] sm:$0xff]
      %v191 = vld [vmem:[%s166 + $0x88] sm:$0xff]
      %v192 = vld [vmem:[%s166 + $0x90] sm:$0xff]
      %v193 = vld [vmem:[%s166 + $0x98] sm:$0xff]
      %v194 = vld [vmem:[%s166 + $0xa0] sm:$0xff]
      %v195 = vld [vmem:[%s166 + $0xa8] sm:$0xff]
      %v196 = vld [vmem:[%s166 + $0xb0] sm:$0xff]
      %v197 = vld [vmem:[%s166 + $0xb8] sm:$0xff]
      %v198 = vld [vmem:[%s166 + $0xc0] sm:$0xff]
      %v199 = vld [vmem:[%s166 + $0xc8] sm:$0xff]
      %v200 = vld [vmem:[%s166 + $0xd0] sm:$0xff]
      %v201 = vld [vmem:[%s166 + $0xd8] sm:$0xff]
      %v202 = vld [vmem:[%s166 + $0xe0] sm:$0xff]
      %v203 = vld [vmem:[%s166 + $0xe8] sm:$0xff]
      %v204 = vld [vmem:[%s166 + $0xf0] sm:$0xff]
      %v205 = vld [vmem:[%s166 + $0xf8] sm:$0xff]
      %v206 = vld [vmem:[%s166 + $0x100] sm:$0xff]
      %v207 = vld [vmem:[%s166 + $0x108] sm:$0xff]
      %v208 = vld [vmem:[%s166 + $0x110] sm:$0xff]
      %v209 = vld [vmem:[%s166 + $0x118] sm:$0xff]
      %v210 = vld [vmem:[%s166 + $0x120] sm:$0xff]
      %v211 = vld [vmem:[%s166 + $0x128] sm:$0xff]
      %v212 = vld [vmem:[%s166 + $0x130] sm:$0xff]
      %v213 = vld [vmem:[%s166 + $0x138] sm:$0xff]
      %v214 = vld [vmem:[%s166 + $0x140] sm:$0xff]
      %v215 = vld [vmem:[%s166 + $0x148] sm:$0xff]
      %v216 = vld [vmem:[%s166 + $0x150] sm:$0xff]
      %v217 = vld [vmem:[%s166 + $0x158] sm:$0xff]
      %v218 = vld [vmem:[%s166 + $0x160] sm:$0xff]
      %v219 = vld [vmem:[%s166 + $0x168] sm:$0xff]
      %v220 = vld [vmem:[%s166 + $0x170] sm:$0xff]
      %v221 = vld [vmem:[%s166 + $0x178] sm:$0xff]
      %v222 = vld [vmem:[%s166 + $0x180] sm:$0xff]
      %v223 = vld [vmem:[%s166 + $0x188] sm:$0xff]
      %v224 = vld [vmem:[%s166 + $0x190] sm:$0xff]
      %v225 = vld [vmem:[%s166 + $0x198] sm:$0xff]
      %v226 = vld [vmem:[%s166 + $0x1a0] sm:$0xff]
      %v227 = vld [vmem:[%s166 + $0x1a8] sm:$0xff]
      %v228 = vld [vmem:[%s166 + $0x1b0] sm:$0xff]
      %v229 = vld [vmem:[%s166 + $0x1b8] sm:$0xff]
      %v230 = vld [vmem:[%s166 + $0x1c0] sm:$0xff]
      %v231 = vld [vmem:[%s166 + $0x1c8] sm:$0xff]
      %v232 = vld [vmem:[%s166 + $0x1d0] sm:$0xff]
      %v233 = vld [vmem:[%s166 + $0x1d8] sm:$0xff]
      %v234 = vld [vmem:[%s166 + $0x1e0] sm:$0xff]
      %v235 = vld [vmem:[%s166 + $0x1e8] sm:$0xff]
      %v236 = vld [vmem:[%s166 + $0x1f0] sm:$0xff]
      %v237 = vld [vmem:[%s166 + $0x1f8] sm:$0xff]
      %v238 = vld [vmem:[%s166 + $0x200] sm:$0xff]
      %v239 = vld [vmem:[%s166 + $0x208] sm:$0xff]
      %v240 = vld [vmem:[%s166 + $0x210] sm:$0xff]
      %v241 = vld [vmem:[%s166 + $0x218] sm:$0xff]
      %v242 = vld [vmem:[%s166 + $0x220] sm:$0xff]
      %v243 = vld [vmem:[%s166 + $0x228] sm:$0xff]
      %v244 = vld [vmem:[%s166 + $0x230] sm:$0xff]
      %v245 = vld [vmem:[%s166 + $0x238] sm:$0xff]
      %v246 = vld [vmem:[%s166 + $0x240] sm:$0xff]
      %v247 = vld [vmem:[%s166 + $0x248] sm:$0xff]
      %v248 = vld [vmem:[%s166 + $0x250] sm:$0xff]
      %v249 = vld [vmem:[%s166 + $0x258] sm:$0xff]
      %v250 = vld [vmem:[%s166 + $0x260] sm:$0xff]
      %v251 = vld [vmem:[%s166 + $0x268] sm:$0xff]
      %v252 = vld [vmem:[%s166 + $0x270] sm:$0xff]
      %v253 = vld [vmem:[%s166 + $0x278] sm:$0xff]
      %v254 = vld [vmem:[%s166 + $0x280] sm:$0xff]
      %v255 = vld [vmem:[%s166 + $0x288] sm:$0xff]
      %v256 = vld [vmem:[%s166 + $0x290] sm:$0xff]
      %v257 = vld [vmem:[%s166 + $0x298] sm:$0xff]
      %v258 = vld [vmem:[%s166 + $0x2a0] sm:$0xff]
      %v259 = vld [vmem:[%s166 + $0x2a8] sm:$0xff]
      %v260 = vld [vmem:[%s166 + $0x2b0] sm:$0xff]
      %v261 = vld [vmem:[%s166 + $0x2b8] sm:$0xff]
      %v262 = vld [vmem:[%s166 + $0x2c0] sm:$0xff]
      %v263 = vld [vmem:[%s166 + $0x2c8] sm:$0xff]
      %v264 = vld [vmem:[%s166 + $0x2d0] sm:$0xff]
      %v265 = vld [vmem:[%s166 + $0x2d8] sm:$0xff]
      %v266 = vld [vmem:[%s166 + $0x2e0] sm:$0xff]
      %v267 = vld [vmem:[%s166 + $0x2e8] sm:$0xff]
      %v268 = vld [vmem:[%s166 + $0x2f0] sm:$0xff]
      %v269 = vld [vmem:[%s166 + $0x2f8] sm:$0xff]
      %v270 = vld [vmem:[%s166 + $0x300] sm:$0xff]
      %v271 = vld [vmem:[%s166 + $0x308] sm:$0xff]
      %v272 = vld [vmem:[%s166 + $0x310] sm:$0xff]
      %v273 = vld [vmem:[%s166 + $0x318] sm:$0xff]
      %v274 = vld [vmem:[%s166 + $0x320] sm:$0xff]
      %v275 = vld [vmem:[%s166 + $0x328] sm:$0xff]
      %v276 = vld [vmem:[%s166 + $0x330] sm:$0xff]
      %v277 = vld [vmem:[%s166 + $0x338] sm:$0xff]
      %v278 = vld [vmem:[%s166 + $0x340] sm:$0xff]
      %v279 = vld [vmem:[%s166 + $0x348] sm:$0xff]
      %v280 = vld [vmem:[%s166 + $0x350] sm:$0xff]
      %v281 = vld [vmem:[%s166 + $0x358] sm:$0xff]
      %v282 = vld [vmem:[%s166 + $0x360] sm:$0xff]
      %v283 = vld [vmem:[%s166 + $0x368] sm:$0xff]
      %v284 = vld [vmem:[%s166 + $0x370] sm:$0xff]
      %v285 = vld [vmem:[%s166 + $0x378] sm:$0xff]
      %v286 = vld [vmem:[%s166 + $0x380] sm:$0xff]
      %v287 = vld [vmem:[%s166 + $0x388] sm:$0xff]
      %v288 = vld [vmem:[%s166 + $0x390] sm:$0xff]
      %v289 = vld [vmem:[%s166 + $0x398] sm:$0xff]
      %v290 = vld [vmem:[%s166 + $0x3a0] sm:$0xff]
      %v291 = vld [vmem:[%s166 + $0x3a8] sm:$0xff]
      %v292 = vld [vmem:[%s166 + $0x3b0] sm:$0xff]
      %v293 = vld [vmem:[%s166 + $0x3b8] sm:$0xff]
      %v294 = vld [vmem:[%s166 + $0x3c0] sm:$0xff]
      %v295 = vld [vmem:[%s166 + $0x3c8] sm:$0xff]
      %v296 = vld [vmem:[%s166 + $0x3d0] sm:$0xff]
      %v297 = vld [vmem:[%s166 + $0x3d8] sm:$0xff]
      %v298 = vld [vmem:[%s166 + $0x3e0] sm:$0xff]
      %v299 = vld [vmem:[%s166 + $0x3e8] sm:$0xff]
      %v300 = vld [vmem:[%s166 + $0x3f0] sm:$0xff]
      %v301 = vld [vmem:[%s166 + $0x3f8] sm:$0xff]
      %v302 = vld [vmem:[%s1] sm:$0xff]
      %v303 = vld [vmem:[%s1 + $0x8] sm:$0xff]
      %v304 = vld [vmem:[%s1 + $0x10] sm:$0xff]
      %v305 = vld [vmem:[%s1 + $0x18] sm:$0xff]
      %v306 = vld [vmem:[%s1 + $0x20] sm:$0xf]
      %v307 = vld [vmem:[%s2] sm:$0x1]
      %v309 = vlaneseq
      %v310 = vshrl.u32 %v309, 7
      %v311 = vsub.s32 0, %v310
      %v312 = vrot.slane %v307, %v311
      %vm314 = vcmask 293888
      %v316 = vsel %vm314, %v174, 0
      %v319 = vsel %vm314, %v175, 0
      %v322 = vsel %vm314, %v176, 0
      %v325 = vsel %vm314, %v177, 0
      %v328 = vsel %vm314, %v178, 0
      %v331 = vsel %vm314, %v179, 0
      %v334 = vsel %vm314, %v180, 0
      %v337 = vsel %vm314, %v181, 0
      %v340 = vsel %vm314, %v182, 0
      %v343 = vsel %vm314, %v183, 0
      %v346 = vsel %vm314, %v184, 0
      %v349 = vsel %vm314, %v185, 0
      %v352 = vsel %vm314, %v186, 0
      %v355 = vsel %vm314, %v187, 0
      %v358 = vsel %vm314, %v188, 0
      %v361 = vsel %vm314, %v189, 0
      %v364 = vsel %vm314, %v190, 0
      %v367 = vsel %vm314, %v191, 0
      %v370 = vsel %vm314, %v192, 0
      %v373 = vsel %vm314, %v193, 0
      %v376 = vsel %vm314, %v194, 0
      %v379 = vsel %vm314, %v195, 0
      %v382 = vsel %vm314, %v196, 0
      %v385 = vsel %vm314, %v197, 0
      %v388 = vsel %vm314, %v198, 0
      %v391 = vsel %vm314, %v199, 0
      %v394 = vsel %vm314, %v200, 0
      %v397 = vsel %vm314, %v201, 0
      %v400 = vsel %vm314, %v202, 0
      %v403 = vsel %vm314, %v203, 0
      %v406 = vsel %vm314, %v204, 0
      %v409 = vsel %vm314, %v205, 0
      %v412 = vsel %vm314, %v206, 0
      %v415 = vsel %vm314, %v207, 0
      %v418 = vsel %vm314, %v208, 0
      %v421 = vsel %vm314, %v209, 0
      %v424 = vsel %vm314, %v210, 0
      %v427 = vsel %vm314, %v211, 0
      %v430 = vsel %vm314, %v212, 0
      %v433 = vsel %vm314, %v213, 0
      %v436 = vsel %vm314, %v214, 0
      %v439 = vsel %vm314, %v215, 0
      %v442 = vsel %vm314, %v216, 0
      %v445 = vsel %vm314, %v217, 0
      %v448 = vsel %vm314, %v218, 0
      %v451 = vsel %vm314, %v219, 0
      %v454 = vsel %vm314, %v220, 0
      %v457 = vsel %vm314, %v221, 0
      %v460 = vsel %vm314, %v222, 0
      %v463 = vsel %vm314, %v223, 0
      %v466 = vsel %vm314, %v224, 0
      %v469 = vsel %vm314, %v225, 0
      %v472 = vsel %vm314, %v226, 0
      %v475 = vsel %vm314, %v227, 0
      %v478 = vsel %vm314, %v228, 0
      %v481 = vsel %vm314, %v229, 0
      %v484 = vsel %vm314, %v230, 0
      %v487 = vsel %vm314, %v231, 0
      %v490 = vsel %vm314, %v232, 0
      %v493 = vsel %vm314, %v233, 0
      %v496 = vsel %vm314, %v234, 0
      %v499 = vsel %vm314, %v235, 0
      %v502 = vsel %vm314, %v236, 0
      %v505 = vsel %vm314, %v237, 0
      %v508 = vsel %vm314, %v238, 0
      %v511 = vsel %vm314, %v239, 0
      %v514 = vsel %vm314, %v240, 0
      %v517 = vsel %vm314, %v241, 0
      %v520 = vsel %vm314, %v242, 0
      %v523 = vsel %vm314, %v243, 0
      %v526 = vsel %vm314, %v244, 0
      %v529 = vsel %vm314, %v245, 0
      %v532 = vsel %vm314, %v246, 0
      %v535 = vsel %vm314, %v247, 0
      %v538 = vsel %vm314, %v248, 0
      %v541 = vsel %vm314, %v249, 0
      %v544 = vsel %vm314, %v250, 0
      %v547 = vsel %vm314, %v251, 0
      %v550 = vsel %vm314, %v252, 0
      %v553 = vsel %vm314, %v253, 0
      %v556 = vsel %vm314, %v254, 0
      %v559 = vsel %vm314, %v255, 0
      %v562 = vsel %vm314, %v256, 0
      %v565 = vsel %vm314, %v257, 0
      %v568 = vsel %vm314, %v258, 0
      %v571 = vsel %vm314, %v259, 0
      %v574 = vsel %vm314, %v260, 0
      %v577 = vsel %vm314, %v261, 0
      %v580 = vsel %vm314, %v262, 0
      %v583 = vsel %vm314, %v263, 0
      %v586 = vsel %vm314, %v264, 0
      %v589 = vsel %vm314, %v265, 0
      %v592 = vsel %vm314, %v266, 0
      %v595 = vsel %vm314, %v267, 0
      %v598 = vsel %vm314, %v268, 0
      %v601 = vsel %vm314, %v269, 0
      %v604 = vsel %vm314, %v270, 0
      %v607 = vsel %vm314, %v271, 0
      %v610 = vsel %vm314, %v272, 0
      %v613 = vsel %vm314, %v273, 0
      %v616 = vsel %vm314, %v274, 0
      %v619 = vsel %vm314, %v275, 0
      %v622 = vsel %vm314, %v276, 0
      %v625 = vsel %vm314, %v277, 0
      %v628 = vsel %vm314, %v278, 0
      %v631 = vsel %vm314, %v279, 0
      %v634 = vsel %vm314, %v280, 0
      %v637 = vsel %vm314, %v281, 0
      %v640 = vsel %vm314, %v282, 0
      %v643 = vsel %vm314, %v283, 0
      %v646 = vsel %vm314, %v284, 0
      %v649 = vsel %vm314, %v285, 0
      %v652 = vsel %vm314, %v286, 0
      %v655 = vsel %vm314, %v287, 0
      %v658 = vsel %vm314, %v288, 0
      %v661 = vsel %vm314, %v289, 0
      %v664 = vsel %vm314, %v290, 0
      %v667 = vsel %vm314, %v291, 0
      %v670 = vsel %vm314, %v292, 0
      %v673 = vsel %vm314, %v293, 0
      %v676 = vsel %vm314, %v294, 0
      %v679 = vsel %vm314, %v295, 0
      %v682 = vsel %vm314, %v296, 0
      %v685 = vsel %vm314, %v297, 0
      %v688 = vsel %vm314, %v298, 0
      %v691 = vsel %vm314, %v299, 0
      %v694 = vsel %vm314, %v300, 0
      %v697 = vsel %vm314, %v301, 0
      %vm699 = vcmask 1043456
      %v701 = vsel %vm699, %v306, 0
      %703 = vmatprep.subr.mxu0 0.0
      %704 = vmatpush1.msra.mxu0 %v302
      %705 = vmatprep.subr.mxu0 0.0
      %706 = vmatpush1.msra.mxu0 %v303
      %707 = vmatprep.subr.mxu0 0.0
      %708 = vmatpush1.msra.mxu0 %v304
      %709 = vmatprep.subr.mxu0 0.0
      %710 = vmatpush1.msra.mxu0 %v305
      %711 = vmatprep.subr.mxu0 0.0
      %712 = vmatpush1.msra.mxu0 %v701
      %713 = vmatprep.subr.mxu0 0.0
      %714 = vmatpush1.msra.mxu0 0.0
      %715 = vmatprep.subr.mxu0 0.0
      %716 = vmatpush1.msra.mxu0 0.0
      %717 = vmatprep.subr.mxu0 0.0
      %718 = vmatpush1.msra.mxu0 0.0
      %719 = vmatprep.subr.mxu0 0.0
      %720 = vmatpush1.msra.mxu0 0.0
      %721 = vmatprep.subr.mxu0 0.0
      %722 = vmatpush1.msra.mxu0 0.0
      %723 = vmatprep.subr.mxu0 0.0
      %724 = vmatpush1.msra.mxu0 0.0
      %725 = vmatprep.subr.mxu0 0.0
      %726 = vmatpush1.msra.mxu0 0.0
      %727 = vmatprep.subr.mxu0 0.0
      %728 = vmatpush1.msra.mxu0 0.0
      %729 = vmatprep.subr.mxu0 0.0
      %730 = vmatpush1.msra.mxu0 0.0
      %731 = vmatprep.subr.mxu0 0.0
      %732 = vmatpush1.msra.mxu0 0.0
      %733 = vmatprep.subr.mxu0 0.0
      %734 = vmatpush1.msra.mxu0 0.0
      %735 = vmatprep.subr.mxu0 0.0
      %736 = vmatpush1.msra.mxu0 0.0
      %737 = vmatprep.subr.mxu0 0.0
      %738 = vmatpush1.msra.mxu0 0.0
      %739 = vmatprep.subr.mxu0 0.0
      %740 = vmatpush1.msra.mxu0 0.0
      %741 = vmatprep.subr.mxu0 0.0
      %742 = vmatpush1.msra.mxu0 0.0
      %743 = vmatprep.subr.mxu0 0.0
      %744 = vmatpush1.msra.mxu0 0.0
      %745 = vmatprep.subr.mxu0 0.0
      %746 = vmatpush1.msra.mxu0 0.0
      %747 = vmatprep.subr.mxu0 0.0
      %748 = vmatpush1.msra.mxu0 0.0
      %749 = vmatprep.subr.mxu0 0.0
      %750 = vmatpush1.msra.mxu0 0.0
      %751 = vmatprep.subr.mxu0 0.0
      %752 = vmatpush1.msra.mxu0 0.0
      %753 = vmatprep.subr.mxu0 0.0
      %754 = vmatpush1.msra.mxu0 0.0
      %755 = vmatprep.subr.mxu0 0.0
      %756 = vmatpush1.msra.mxu0 0.0
      %757 = vmatprep.subr.mxu0 0.0
      %758 = vmatpush1.msra.mxu0 0.0
      %759 = vmatprep.subr.mxu0 0.0
      %760 = vmatpush1.msra.mxu0 0.0
      %761 = vmatprep.subr.mxu0 0.0
      %762 = vmatpush1.msra.mxu0 0.0
      %763 = vmatprep.subr.mxu0 0.0
      %764 = vmatpush1.msra.mxu0 0.0
      %765 = vmatprep.subr.mxu0 0.0
      %766 = vmatpush1.msra.mxu0 0.0
      %767 = vmatprep.mubr.f32.mxu0 0.0
      %768 = vmatmul.mubr.f32.gmra.mrb[0].mxu0 %v316
      %v769 = vpop.f32.mrb[0].mxu0
      %v770 = vadd.f32 %v312, %v769
      %v771 = vpop.f32.mrb[0].mxu0
      %772 = vmatprep.mubr.f32.mxu0 0.0
      %773 = vmatmul.mubr.f32.gmra.mrb[0].mxu0 %v319
      %v774 = vpop.f32.mrb[0].mxu0
      %v775 = vadd.f32 %v312, %v774
      %v776 = vpop.f32.mrb[0].mxu0
      %777 = vmatprep.mubr.f32.mxu0 0.0
      %778 = vmatmul.mubr.f32.gmra.mrb[0].mxu0 %v322
      %v779 = vpop.f32.mrb[0].mxu0
      %v780 = vadd.f32 %v312, %v779
      %v781 = vpop.f32.mrb[0].mxu0
      %782 = vmatprep.mubr.f32.mxu0 0.0
      %783 = vmatmul.mubr.f32.gmra.mrb[0].mxu0 %v325
      %v784 = vpop.f32.mrb[0].mxu0
      %v785 = vadd.f32 %v312, %v784
      %v786 = vpop.f32.mrb[0].mxu0
      %787 = vmatprep.mubr.f32.mxu0 0.0
      %788 = vmatmul.mubr.f32.gmra.mrb[0].mxu0 %v328
      %v789 = vpop.f32.mrb[0].mxu0
      %v790 = vadd.f32 %v312, %v789
      %v791 = vpop.f32.mrb[0].mxu0
      %792 = vmatprep.mubr.f32.mxu0 0.0
      %793 = vmatmul.mubr.f32.gmra.mrb[0].mxu0 %v331
      %v794 = vpop.f32.mrb[0].mxu0
      %v795 = vadd.f32 %v312, %v794
      %v796 = vpop.f32.mrb[0].mxu0
      %797 = vmatprep.mubr.f32.mxu0 0.0
      %798 = vmatmul.mubr.f32.gmra.mrb[0].mxu0 %v334
      %v799 = vpop.f32.mrb[0].mxu0
      %v800 = vadd.f32 %v312, %v799
      %v801 = vpop.f32.mrb[0].mxu0
      %802 = vmatprep.mubr.f32.mxu0 0.0
      %803 = vmatmul.mubr.f32.gmra.mrb[0].mxu0 %v337
      %v804 = vpop.f32.mrb[0].mxu0
      %v805 = vadd.f32 %v312, %v804
      %v806 = vpop.f32.mrb[0].mxu0
      %807 = vmatprep.mubr.f32.mxu0 0.0
      %808 = vmatmul.mubr.f32.gmra.mrb[0].mxu0 %v340
      %v809 = vpop.f32.mrb[0].mxu0
      %v810 = vadd.f32 %v312, %v809
      %v811 = vpop.f32.mrb[0].mxu0
      %812 = vmatprep.mubr.f32.mxu0 0.0
      %813 = vmatmul.mubr.f32.gmra.mrb[0].mxu0 %v343
      %v814 = vpop.f32.mrb[0].mxu0
      %v815 = vadd.f32 %v312, %v814
      %v816 = vpop.f32.mrb[0].mxu0
      %817 = vmatprep.mubr.f32.mxu0 0.0
      %818 = vmatmul.mubr.f32.gmra.mrb[0].mxu0 %v346
      %v819 = vpop.f32.mrb[0].mxu0
      %v820 = vadd.f32 %v312, %v819
      %v821 = vpop.f32.mrb[0].mxu0
      %822 = vmatprep.mubr.f32.mxu0 0.0
      %823 = vmatmul.mubr.f32.gmra.mrb[0].mxu0 %v349
      %v824 = vpop.f32.mrb[0].mxu0
      %v825 = vadd.f32 %v312, %v824
      %v826 = vpop.f32.mrb[0].mxu0
      %827 = vmatprep.mubr.f32.mxu0 0.0
      %828 = vmatmul.mubr.f32.gmra.mrb[0].mxu0 %v352
      %v829 = vpop.f32.mrb[0].mxu0
      %v830 = vadd.f32 %v312, %v829
      %v831 = vpop.f32.mrb[0].mxu0
      %832 = vmatprep.mubr.f32.mxu0 0.0
      %833 = vmatmul.mubr.f32.gmra.mrb[0].mxu0 %v355
      %v834 = vpop.f32.mrb[0].mxu0
      %v835 = vadd.f32 %v312, %v834
      %v836 = vpop.f32.mrb[0].mxu0
      %837 = vmatprep.mubr.f32.mxu0 0.0
      %838 = vmatmul.mubr.f32.gmra.mrb[0].mxu0 %v358
      %v839 = vpop.f32.mrb[0].mxu0
      %v840 = vadd.f32 %v312, %v839
      %v841 = vpop.f32.mrb[0].mxu0
      %842 = vmatprep.mubr.f32.mxu0 0.0
      %843 = vmatmul.mubr.f32.gmra.mrb[0].mxu0 %v361
      %v844 = vpop.f32.mrb[0].mxu0
      %v845 = vadd.f32 %v312, %v844
      %v846 = vpop.f32.mrb[0].mxu0
      %847 = vmatprep.mubr.f32.mxu0 0.0
      %848 = vmatmul.mubr.f32.gmra.mrb[0].mxu0 %v364
      %v849 = vpop.f32.mrb[0].mxu0
      %v850 = vadd.f32 %v312, %v849
      %v851 = vpop.f32.mrb[0].mxu0
      %852 = vmatprep.mubr.f32.mxu0 0.0
      %853 = vmatmul.mubr.f32.gmra.mrb[0].mxu0 %v367
      %v854 = vpop.f32.mrb[0].mxu0
      %v855 = vadd.f32 %v312, %v854
      %v856 = vpop.f32.mrb[0].mxu0
      %857 = vmatprep.mubr.f32.mxu0 0.0
      %858 = vmatmul.mubr.f32.gmra.mrb[0].mxu0 %v370
      %v859 = vpop.f32.mrb[0].mxu0
      %v860 = vadd.f32 %v312, %v859
      %v861 = vpop.f32.mrb[0].mxu0
      %862 = vmatprep.mubr.f32.mxu0 0.0
      %863 = vmatmul.mubr.f32.gmra.mrb[0].mxu0 %v373
      %v864 = vpop.f32.mrb[0].mxu0
      %v865 = vadd.f32 %v312, %v864
      %v866 = vpop.f32.mrb[0].mxu0
      %867 = vmatprep.mubr.f32.mxu0 0.0
      %868 = vmatmul.mubr.f32.gmra.mrb[0].mxu0 %v376
      %v869 = vpop.f32.mrb[0].mxu0
      %v870 = vadd.f32 %v312, %v869
      %v871 = vpop.f32.mrb[0].mxu0
      %872 = vmatprep.mubr.f32.mxu0 0.0
      %873 = vmatmul.mubr.f32.gmra.mrb[0].mxu0 %v379
      %v874 = vpop.f32.mrb[0].mxu0
      %v875 = vadd.f32 %v312, %v874
      %v876 = vpop.f32.mrb[0].mxu0
      %877 = vmatprep.mubr.f32.mxu0 0.0
      %878 = vmatmul.mubr.f32.gmra.mrb[0].mxu0 %v382
      %v879 = vpop.f32.mrb[0].mxu0
      %v880 = vadd.f32 %v312, %v879
      %v881 = vpop.f32.mrb[0].mxu0
      %882 = vmatprep.mubr.f32.mxu0 0.0
      %883 = vmatmul.mubr.f32.gmra.mrb[0].mxu0 %v385
      %v884 = vpop.f32.mrb[0].mxu0
      %v885 = vadd.f32 %v312, %v884
      %v886 = vpop.f32.mrb[0].mxu0
      %887 = vmatprep.mubr.f32.mxu0 0.0
      %888 = vmatmul.mubr.f32.gmra.mrb[0].mxu0 %v388
      %v889 = vpop.f32.mrb[0].mxu0
      %v890 = vadd.f32 %v312, %v889
      %v891 = vpop.f32.mrb[0].mxu0
      %892 = vmatprep.mubr.f32.mxu0 0.0
      %893 = vmatmul.mubr.f32.gmra.mrb[0].mxu0 %v391
      %v894 = vpop.f32.mrb[0].mxu0
      %v895 = vadd.f32 %v312, %v894
      %v896 = vpop.f32.mrb[0].mxu0
      %897 = vmatprep.mubr.f32.mxu0 0.0
      %898 = vmatmul.mubr.f32.gmra.mrb[0].mxu0 %v394
      %v899 = vpop.f32.mrb[0].mxu0
      %v900 = vadd.f32 %v312, %v899
      %v901 = vpop.f32.mrb[0].mxu0
      %902 = vmatprep.mubr.f32.mxu0 0.0
      %903 = vmatmul.mubr.f32.gmra.mrb[0].mxu0 %v397
      %v904 = vpop.f32.mrb[0].mxu0
      %v905 = vadd.f32 %v312, %v904
      %v906 = vpop.f32.mrb[0].mxu0
      %907 = vmatprep.mubr.f32.mxu0 0.0
      %908 = vmatmul.mubr.f32.gmra.mrb[0].mxu0 %v400
      %v909 = vpop.f32.mrb[0].mxu0
      %v910 = vadd.f32 %v312, %v909
      %v911 = vpop.f32.mrb[0].mxu0
      %912 = vmatprep.mubr.f32.mxu0 0.0
      %913 = vmatmul.mubr.f32.gmra.mrb[0].mxu0 %v403
      %v914 = vpop.f32.mrb[0].mxu0
      %v915 = vadd.f32 %v312, %v914
      %v916 = vpop.f32.mrb[0].mxu0
      %917 = vmatprep.mubr.f32.mxu0 0.0
      %918 = vmatmul.mubr.f32.gmra.mrb[0].mxu0 %v406
      %v919 = vpop.f32.mrb[0].mxu0
      %v920 = vadd.f32 %v312, %v919
      %v921 = vpop.f32.mrb[0].mxu0
      %922 = vmatprep.mubr.f32.mxu0 0.0
      %923 = vmatmul.mubr.f32.gmra.mrb[0].mxu0 %v409
      %v924 = vpop.f32.mrb[0].mxu0
      %v925 = vadd.f32 %v312, %v924
      %v926 = vpop.f32.mrb[0].mxu0
      %927 = vmatprep.mubr.f32.mxu0 0.0
      %928 = vmatmul.mubr.f32.gmra.mrb[0].mxu0 %v412
      %v929 = vpop.f32.mrb[0].mxu0
      %v930 = vadd.f32 %v312, %v929
      %v931 = vpop.f32.mrb[0].mxu0
      %932 = vmatprep.mubr.f32.mxu0 0.0
      %933 = vmatmul.mubr.f32.gmra.mrb[0].mxu0 %v415
      %v934 = vpop.f32.mrb[0].mxu0
      %v935 = vadd.f32 %v312, %v934
      %v936 = vpop.f32.mrb[0].mxu0
      %937 = vmatprep.mubr.f32.mxu0 0.0
      %938 = vmatmul.mubr.f32.gmra.mrb[0].mxu0 %v418
      %v939 = vpop.f32.mrb[0].mxu0
      %v940 = vadd.f32 %v312, %v939
      %v941 = vpop.f32.mrb[0].mxu0
      %942 = vmatprep.mubr.f32.mxu0 0.0
      %943 = vmatmul.mubr.f32.gmra.mrb[0].mxu0 %v421
      %v944 = vpop.f32.mrb[0].mxu0
      %v945 = vadd.f32 %v312, %v944
      %v946 = vpop.f32.mrb[0].mxu0
      %947 = vmatprep.mubr.f32.mxu0 0.0
      %948 = vmatmul.mubr.f32.gmra.mrb[0].mxu0 %v424
      %v949 = vpop.f32.mrb[0].mxu0
      %v950 = vadd.f32 %v312, %v949
      %v951 = vpop.f32.mrb[0].mxu0
      %952 = vmatprep.mubr.f32.mxu0 0.0
      %953 = vmatmul.mubr.f32.gmra.mrb[0].mxu0 %v427
      %v954 = vpop.f32.mrb[0].mxu0
      %v955 = vadd.f32 %v312, %v954
      %v956 = vpop.f32.mrb[0].mxu0
      %957 = vmatprep.mubr.f32.mxu0 0.0
      %958 = vmatmul.mubr.f32.gmra.mrb[0].mxu0 %v430
      %v959 = vpop.f32.mrb[0].mxu0
      %v960 = vadd.f32 %v312, %v959
      %v961 = vpop.f32.mrb[0].mxu0
      %962 = vmatprep.mubr.f32.mxu0 0.0
      %963 = vmatmul.mubr.f32.gmra.mrb[0].mxu0 %v433
      %v964 = vpop.f32.mrb[0].mxu0
      %v965 = vadd.f32 %v312, %v964
      %v966 = vpop.f32.mrb[0].mxu0
      %967 = vmatprep.mubr.f32.mxu0 0.0
      %968 = vmatmul.mubr.f32.gmra.mrb[0].mxu0 %v436
      %v969 = vpop.f32.mrb[0].mxu0
      %v970 = vadd.f32 %v312, %v969
      %v971 = vpop.f32.mrb[0].mxu0
      %972 = vmatprep.mubr.f32.mxu0 0.0
      %973 = vmatmul.mubr.f32.gmra.mrb[0].mxu0 %v439
      %v974 = vpop.f32.mrb[0].mxu0
      %v975 = vadd.f32 %v312, %v974
      %v976 = vpop.f32.mrb[0].mxu0
      %977 = vmatprep.mubr.f32.mxu0 0.0
      %978 = vmatmul.mubr.f32.gmra.mrb[0].mxu0 %v442
      %v979 = vpop.f32.mrb[0].mxu0
      %v980 = vadd.f32 %v312, %v979
      %v981 = vpop.f32.mrb[0].mxu0
      %982 = vmatprep.mubr.f32.mxu0 0.0
      %983 = vmatmul.mubr.f32.gmra.mrb[0].mxu0 %v445
      %v984 = vpop.f32.mrb[0].mxu0
      %v985 = vadd.f32 %v312, %v984
      %v986 = vpop.f32.mrb[0].mxu0
      %987 = vmatprep.mubr.f32.mxu0 0.0
      %988 = vmatmul.mubr.f32.gmra.mrb[0].mxu0 %v448
      %v989 = vpop.f32.mrb[0].mxu0
      %v990 = vadd.f32 %v312, %v989
      %v991 = vpop.f32.mrb[0].mxu0
      %992 = vmatprep.mubr.f32.mxu0 0.0
      %993 = vmatmul.mubr.f32.gmra.mrb[0].mxu0 %v451
      %v994 = vpop.f32.mrb[0].mxu0
      %v995 = vadd.f32 %v312, %v994
      %v996 = vpop.f32.mrb[0].mxu0
      %997 = vmatprep.mubr.f32.mxu0 0.0
      %998 = vmatmul.mubr.f32.gmra.mrb[0].mxu0 %v454
      %v999 = vpop.f32.mrb[0].mxu0
      %v1000 = vadd.f32 %v312, %v999
      %v1001 = vpop.f32.mrb[0].mxu0
      %1002 = vmatprep.mubr.f32.mxu0 0.0
      %1003 = vmatmul.mubr.f32.gmra.mrb[0].mxu0 %v457
      %v1004 = vpop.f32.mrb[0].mxu0
      %v1005 = vadd.f32 %v312, %v1004
      %v1006 = vpop.f32.mrb[0].mxu0
      %1007 = vmatprep.mubr.f32.mxu0 0.0
      %1008 = vmatmul.mubr.f32.gmra.mrb[0].mxu0 %v460
      %v1009 = vpop.f32.mrb[0].mxu0
      %v1010 = vadd.f32 %v312, %v1009
      %v1011 = vpop.f32.mrb[0].mxu0
      %1012 = vmatprep.mubr.f32.mxu0 0.0
      %1013 = vmatmul.mubr.f32.gmra.mrb[0].mxu0 %v463
      %v1014 = vpop.f32.mrb[0].mxu0
      %v1015 = vadd.f32 %v312, %v1014
      %v1016 = vpop.f32.mrb[0].mxu0
      %1017 = vmatprep.mubr.f32.mxu0 0.0
      %1018 = vmatmul.mubr.f32.gmra.mrb[0].mxu0 %v466
      %v1019 = vpop.f32.mrb[0].mxu0
      %v1020 = vadd.f32 %v312, %v1019
      %v1021 = vpop.f32.mrb[0].mxu0
      %1022 = vmatprep.mubr.f32.mxu0 0.0
      %1023 = vmatmul.mubr.f32.gmra.mrb[0].mxu0 %v469
      %v1024 = vpop.f32.mrb[0].mxu0
      %v1025 = vadd.f32 %v312, %v1024
      %v1026 = vpop.f32.mrb[0].mxu0
      %1027 = vmatprep.mubr.f32.mxu0 0.0
      %1028 = vmatmul.mubr.f32.gmra.mrb[0].mxu0 %v472
      %v1029 = vpop.f32.mrb[0].mxu0
      %v1030 = vadd.f32 %v312, %v1029
      %v1031 = vpop.f32.mrb[0].mxu0
      %1032 = vmatprep.mubr.f32.mxu0 0.0
      %1033 = vmatmul.mubr.f32.gmra.mrb[0].mxu0 %v475
      %v1034 = vpop.f32.mrb[0].mxu0
      %v1035 = vadd.f32 %v312, %v1034
      %v1036 = vpop.f32.mrb[0].mxu0
      %1037 = vmatprep.mubr.f32.mxu0 0.0
      %1038 = vmatmul.mubr.f32.gmra.mrb[0].mxu0 %v478
      %v1039 = vpop.f32.mrb[0].mxu0
      %v1040 = vadd.f32 %v312, %v1039
      %v1041 = vpop.f32.mrb[0].mxu0
      %1042 = vmatprep.mubr.f32.mxu0 0.0
      %1043 = vmatmul.mubr.f32.gmra.mrb[0].mxu0 %v481
      %v1044 = vpop.f32.mrb[0].mxu0
      %v1045 = vadd.f32 %v312, %v1044
      %v1046 = vpop.f32.mrb[0].mxu0
      %1047 = vmatprep.mubr.f32.mxu0 0.0
      %1048 = vmatmul.mubr.f32.gmra.mrb[0].mxu0 %v484
      %v1049 = vpop.f32.mrb[0].mxu0
      %v1050 = vadd.f32 %v312, %v1049
      %v1051 = vpop.f32.mrb[0].mxu0
      %1052 = vmatprep.mubr.f32.mxu0 0.0
      %1053 = vmatmul.mubr.f32.gmra.mrb[0].mxu0 %v487
      %v1054 = vpop.f32.mrb[0].mxu0
      %v1055 = vadd.f32 %v312, %v1054
      %v1056 = vpop.f32.mrb[0].mxu0
      %1057 = vmatprep.mubr.f32.mxu0 0.0
      %1058 = vmatmul.mubr.f32.gmra.mrb[0].mxu0 %v490
      %v1059 = vpop.f32.mrb[0].mxu0
      %v1060 = vadd.f32 %v312, %v1059
      %v1061 = vpop.f32.mrb[0].mxu0
      %1062 = vmatprep.mubr.f32.mxu0 0.0
      %1063 = vmatmul.mubr.f32.gmra.mrb[0].mxu0 %v493
      %v1064 = vpop.f32.mrb[0].mxu0
      %v1065 = vadd.f32 %v312, %v1064
      %v1066 = vpop.f32.mrb[0].mxu0
      %1067 = vmatprep.mubr.f32.mxu0 0.0
      %1068 = vmatmul.mubr.f32.gmra.mrb[0].mxu0 %v496
      %v1069 = vpop.f32.mrb[0].mxu0
      %v1070 = vadd.f32 %v312, %v1069
      %v1071 = vpop.f32.mrb[0].mxu0
      %1072 = vmatprep.mubr.f32.mxu0 0.0
      %1073 = vmatmul.mubr.f32.gmra.mrb[0].mxu0 %v499
      %v1074 = vpop.f32.mrb[0].mxu0
      %v1075 = vadd.f32 %v312, %v1074
      %v1076 = vpop.f32.mrb[0].mxu0
      %1077 = vmatprep.mubr.f32.mxu0 0.0
      %1078 = vmatmul.mubr.f32.gmra.mrb[0].mxu0 %v502
      %v1079 = vpop.f32.mrb[0].mxu0
      %v1080 = vadd.f32 %v312, %v1079
      %v1081 = vpop.f32.mrb[0].mxu0
      %1082 = vmatprep.mubr.f32.mxu0 0.0
      %1083 = vmatmul.mubr.f32.gmra.mrb[0].mxu0 %v505
      %v1084 = vpop.f32.mrb[0].mxu0
      %v1085 = vadd.f32 %v312, %v1084
      %v1086 = vpop.f32.mrb[0].mxu0
      %1087 = vmatprep.mubr.f32.mxu0 0.0
      %1088 = vmatmul.mubr.f32.gmra.mrb[0].mxu0 %v508
      %v1089 = vpop.f32.mrb[0].mxu0
      %v1090 = vadd.f32 %v312, %v1089
      %v1091 = vpop.f32.mrb[0].mxu0
      %1092 = vmatprep.mubr.f32.mxu0 0.0
      %1093 = vmatmul.mubr.f32.gmra.mrb[0].mxu0 %v511
      %v1094 = vpop.f32.mrb[0].mxu0
      %v1095 = vadd.f32 %v312, %v1094
      %v1096 = vpop.f32.mrb[0].mxu0
      %1097 = vmatprep.mubr.f32.mxu0 0.0
      %1098 = vmatmul.mubr.f32.gmra.mrb[0].mxu0 %v514
      %v1099 = vpop.f32.mrb[0].mxu0
      %v1100 = vadd.f32 %v312, %v1099
      %v1101 = vpop.f32.mrb[0].mxu0
      %1102 = vmatprep.mubr.f32.mxu0 0.0
      %1103 = vmatmul.mubr.f32.gmra.mrb[0].mxu0 %v517
      %v1104 = vpop.f32.mrb[0].mxu0
      %v1105 = vadd.f32 %v312, %v1104
      %v1106 = vpop.f32.mrb[0].mxu0
      %1107 = vmatprep.mubr.f32.mxu0 0.0
      %1108 = vmatmul.mubr.f32.gmra.mrb[0].mxu0 %v520
      %v1109 = vpop.f32.mrb[0].mxu0
      %v1110 = vadd.f32 %v312, %v1109
      %v1111 = vpop.f32.mrb[0].mxu0
      %1112 = vmatprep.mubr.f32.mxu0 0.0
      %1113 = vmatmul.mubr.f32.gmra.mrb[0].mxu0 %v523
      %v1114 = vpop.f32.mrb[0].mxu0
      %v1115 = vadd.f32 %v312, %v1114
      %v1116 = vpop.f32.mrb[0].mxu0
      %1117 = vmatprep.mubr.f32.mxu0 0.0
      %1118 = vmatmul.mubr.f32.gmra.mrb[0].mxu0 %v526
      %v1119 = vpop.f32.mrb[0].mxu0
      %v1120 = vadd.f32 %v312, %v1119
      %v1121 = vpop.f32.mrb[0].mxu0
      %1122 = vmatprep.mubr.f32.mxu0 0.0
      %1123 = vmatmul.mubr.f32.gmra.mrb[0].mxu0 %v529
      %v1124 = vpop.f32.mrb[0].mxu0
      %v1125 = vadd.f32 %v312, %v1124
      %v1126 = vpop.f32.mrb[0].mxu0
      %1127 = vmatprep.mubr.f32.mxu0 0.0
      %1128 = vmatmul.mubr.f32.gmra.mrb[0].mxu0 %v532
      %v1129 = vpop.f32.mrb[0].mxu0
      %v1130 = vadd.f32 %v312, %v1129
      %v1131 = vpop.f32.mrb[0].mxu0
      %1132 = vmatprep.mubr.f32.mxu0 0.0
      %1133 = vmatmul.mubr.f32.gmra.mrb[0].mxu0 %v535
      %v1134 = vpop.f32.mrb[0].mxu0
      %v1135 = vadd.f32 %v312, %v1134
      %v1136 = vpop.f32.mrb[0].mxu0
      %1137 = vmatprep.mubr.f32.mxu0 0.0
      %1138 = vmatmul.mubr.f32.gmra.mrb[0].mxu0 %v538
      %v1139 = vpop.f32.mrb[0].mxu0
      %v1140 = vadd.f32 %v312, %v1139
      %v1141 = vpop.f32.mrb[0].mxu0
      %1142 = vmatprep.mubr.f32.mxu0 0.0
      %1143 = vmatmul.mubr.f32.gmra.mrb[0].mxu0 %v541
      %v1144 = vpop.f32.mrb[0].mxu0
      %v1145 = vadd.f32 %v312, %v1144
      %v1146 = vpop.f32.mrb[0].mxu0
      %1147 = vmatprep.mubr.f32.mxu0 0.0
      %1148 = vmatmul.mubr.f32.gmra.mrb[0].mxu0 %v544
      %v1149 = vpop.f32.mrb[0].mxu0
      %v1150 = vadd.f32 %v312, %v1149
      %v1151 = vpop.f32.mrb[0].mxu0
      %1152 = vmatprep.mubr.f32.mxu0 0.0
      %1153 = vmatmul.mubr.f32.gmra.mrb[0].mxu0 %v547
      %v1154 = vpop.f32.mrb[0].mxu0
      %v1155 = vadd.f32 %v312, %v1154
      %v1156 = vpop.f32.mrb[0].mxu0
      %1157 = vmatprep.mubr.f32.mxu0 0.0
      %1158 = vmatmul.mubr.f32.gmra.mrb[0].mxu0 %v550
      %v1159 = vpop.f32.mrb[0].mxu0
      %v1160 = vadd.f32 %v312, %v1159
      %v1161 = vpop.f32.mrb[0].mxu0
      %1162 = vmatprep.mubr.f32.mxu0 0.0
      %1163 = vmatmul.mubr.f32.gmra.mrb[0].mxu0 %v553
      %v1164 = vpop.f32.mrb[0].mxu0
      %v1165 = vadd.f32 %v312, %v1164
      %v1166 = vpop.f32.mrb[0].mxu0
      %1167 = vmatprep.mubr.f32.mxu0 0.0
      %1168 = vmatmul.mubr.f32.gmra.mrb[0].mxu0 %v556
      %v1169 = vpop.f32.mrb[0].mxu0
      %v1170 = vadd.f32 %v312, %v1169
      %v1171 = vpop.f32.mrb[0].mxu0
      %1172 = vmatprep.mubr.f32.mxu0 0.0
      %1173 = vmatmul.mubr.f32.gmra.mrb[0].mxu0 %v559
      %v1174 = vpop.f32.mrb[0].mxu0
      %v1175 = vadd.f32 %v312, %v1174
      %v1176 = vpop.f32.mrb[0].mxu0
      %1177 = vmatprep.mubr.f32.mxu0 0.0
      %1178 = vmatmul.mubr.f32.gmra.mrb[0].mxu0 %v562
      %v1179 = vpop.f32.mrb[0].mxu0
      %v1180 = vadd.f32 %v312, %v1179
      %v1181 = vpop.f32.mrb[0].mxu0
      %1182 = vmatprep.mubr.f32.mxu0 0.0
      %1183 = vmatmul.mubr.f32.gmra.mrb[0].mxu0 %v565
      %v1184 = vpop.f32.mrb[0].mxu0
      %v1185 = vadd.f32 %v312, %v1184
      %v1186 = vpop.f32.mrb[0].mxu0
      %1187 = vmatprep.mubr.f32.mxu0 0.0
      %1188 = vmatmul.mubr.f32.gmra.mrb[0].mxu0 %v568
      %v1189 = vpop.f32.mrb[0].mxu0
      %v1190 = vadd.f32 %v312, %v1189
      %v1191 = vpop.f32.mrb[0].mxu0
      %1192 = vmatprep.mubr.f32.mxu0 0.0
      %1193 = vmatmul.mubr.f32.gmra.mrb[0].mxu0 %v571
      %v1194 = vpop.f32.mrb[0].mxu0
      %v1195 = vadd.f32 %v312, %v1194
      %v1196 = vpop.f32.mrb[0].mxu0
      %1197 = vmatprep.mubr.f32.mxu0 0.0
      %1198 = vmatmul.mubr.f32.gmra.mrb[0].mxu0 %v574
      %v1199 = vpop.f32.mrb[0].mxu0
      %v1200 = vadd.f32 %v312, %v1199
      %v1201 = vpop.f32.mrb[0].mxu0
      %1202 = vmatprep.mubr.f32.mxu0 0.0
      %1203 = vmatmul.mubr.f32.gmra.mrb[0].mxu0 %v577
      %v1204 = vpop.f32.mrb[0].mxu0
      %v1205 = vadd.f32 %v312, %v1204
      %v1206 = vpop.f32.mrb[0].mxu0
      %1207 = vmatprep.mubr.f32.mxu0 0.0
      %1208 = vmatmul.mubr.f32.gmra.mrb[0].mxu0 %v580
      %v1209 = vpop.f32.mrb[0].mxu0
      %v1210 = vadd.f32 %v312, %v1209
      %v1211 = vpop.f32.mrb[0].mxu0
      %1212 = vmatprep.mubr.f32.mxu0 0.0
      %1213 = vmatmul.mubr.f32.gmra.mrb[0].mxu0 %v583
      %v1214 = vpop.f32.mrb[0].mxu0
      %v1215 = vadd.f32 %v312, %v1214
      %v1216 = vpop.f32.mrb[0].mxu0
      %1217 = vmatprep.mubr.f32.mxu0 0.0
      %1218 = vmatmul.mubr.f32.gmra.mrb[0].mxu0 %v586
      %v1219 = vpop.f32.mrb[0].mxu0
      %v1220 = vadd.f32 %v312, %v1219
      %v1221 = vpop.f32.mrb[0].mxu0
      %1222 = vmatprep.mubr.f32.mxu0 0.0
      %1223 = vmatmul.mubr.f32.gmra.mrb[0].mxu0 %v589
      %v1224 = vpop.f32.mrb[0].mxu0
      %v1225 = vadd.f32 %v312, %v1224
      %v1226 = vpop.f32.mrb[0].mxu0
      %1227 = vmatprep.mubr.f32.mxu0 0.0
      %1228 = vmatmul.mubr.f32.gmra.mrb[0].mxu0 %v592
      %v1229 = vpop.f32.mrb[0].mxu0
      %v1230 = vadd.f32 %v312, %v1229
      %v1231 = vpop.f32.mrb[0].mxu0
      %1232 = vmatprep.mubr.f32.mxu0 0.0
      %1233 = vmatmul.mubr.f32.gmra.mrb[0].mxu0 %v595
      %v1234 = vpop.f32.mrb[0].mxu0
      %v1235 = vadd.f32 %v312, %v1234
      %v1236 = vpop.f32.mrb[0].mxu0
      %1237 = vmatprep.mubr.f32.mxu0 0.0
      %1238 = vmatmul.mubr.f32.gmra.mrb[0].mxu0 %v598
      %v1239 = vpop.f32.mrb[0].mxu0
      %v1240 = vadd.f32 %v312, %v1239
      %v1241 = vpop.f32.mrb[0].mxu0
      %1242 = vmatprep.mubr.f32.mxu0 0.0
      %1243 = vmatmul.mubr.f32.gmra.mrb[0].mxu0 %v601
      %v1244 = vpop.f32.mrb[0].mxu0
      %v1245 = vadd.f32 %v312, %v1244
      %v1246 = vpop.f32.mrb[0].mxu0
      %1247 = vmatprep.mubr.f32.mxu0 0.0
      %1248 = vmatmul.mubr.f32.gmra.mrb[0].mxu0 %v604
      %v1249 = vpop.f32.mrb[0].mxu0
      %v1250 = vadd.f32 %v312, %v1249
      %v1251 = vpop.f32.mrb[0].mxu0
      %1252 = vmatprep.mubr.f32.mxu0 0.0
      %1253 = vmatmul.mubr.f32.gmra.mrb[0].mxu0 %v607
      %v1254 = vpop.f32.mrb[0].mxu0
      %v1255 = vadd.f32 %v312, %v1254
      %v1256 = vpop.f32.mrb[0].mxu0
      %1257 = vmatprep.mubr.f32.mxu0 0.0
      %1258 = vmatmul.mubr.f32.gmra.mrb[0].mxu0 %v610
      %v1259 = vpop.f32.mrb[0].mxu0
      %v1260 = vadd.f32 %v312, %v1259
      %v1261 = vpop.f32.mrb[0].mxu0
      %1262 = vmatprep.mubr.f32.mxu0 0.0
      %1263 = vmatmul.mubr.f32.gmra.mrb[0].mxu0 %v613
      %v1264 = vpop.f32.mrb[0].mxu0
      %v1265 = vadd.f32 %v312, %v1264
      %v1266 = vpop.f32.mrb[0].mxu0
      %1267 = vmatprep.mubr.f32.mxu0 0.0
      %1268 = vmatmul.mubr.f32.gmra.mrb[0].mxu0 %v616
      %v1269 = vpop.f32.mrb[0].mxu0
      %v1270 = vadd.f32 %v312, %v1269
      %v1271 = vpop.f32.mrb[0].mxu0
      %1272 = vmatprep.mubr.f32.mxu0 0.0
      %1273 = vmatmul.mubr.f32.gmra.mrb[0].mxu0 %v619
      %v1274 = vpop.f32.mrb[0].mxu0
      %v1275 = vadd.f32 %v312, %v1274
      %v1276 = vpop.f32.mrb[0].mxu0
      %1277 = vmatprep.mubr.f32.mxu0 0.0
      %1278 = vmatmul.mubr.f32.gmra.mrb[0].mxu0 %v622
      %v1279 = vpop.f32.mrb[0].mxu0
      %v1280 = vadd.f32 %v312, %v1279
      %v1281 = vpop.f32.mrb[0].mxu0
      %1282 = vmatprep.mubr.f32.mxu0 0.0
      %1283 = vmatmul.mubr.f32.gmra.mrb[0].mxu0 %v625
      %v1284 = vpop.f32.mrb[0].mxu0
      %v1285 = vadd.f32 %v312, %v1284
      %v1286 = vpop.f32.mrb[0].mxu0
      %1287 = vmatprep.mubr.f32.mxu0 0.0
      %1288 = vmatmul.mubr.f32.gmra.mrb[0].mxu0 %v628
      %v1289 = vpop.f32.mrb[0].mxu0
      %v1290 = vadd.f32 %v312, %v1289
      %v1291 = vpop.f32.mrb[0].mxu0
      %1292 = vmatprep.mubr.f32.mxu0 0.0
      %1293 = vmatmul.mubr.f32.gmra.mrb[0].mxu0 %v631
      %v1294 = vpop.f32.mrb[0].mxu0
      %v1295 = vadd.f32 %v312, %v1294
      %v1296 = vpop.f32.mrb[0].mxu0
      %1297 = vmatprep.mubr.f32.mxu0 0.0
      %1298 = vmatmul.mubr.f32.gmra.mrb[0].mxu0 %v634
      %v1299 = vpop.f32.mrb[0].mxu0
      %v1300 = vadd.f32 %v312, %v1299
      %v1301 = vpop.f32.mrb[0].mxu0
      %1302 = vmatprep.mubr.f32.mxu0 0.0
      %1303 = vmatmul.mubr.f32.gmra.mrb[0].mxu0 %v637
      %v1304 = vpop.f32.mrb[0].mxu0
      %v1305 = vadd.f32 %v312, %v1304
      %v1306 = vpop.f32.mrb[0].mxu0
      %1307 = vmatprep.mubr.f32.mxu0 0.0
      %1308 = vmatmul.mubr.f32.gmra.mrb[0].mxu0 %v640
      %v1309 = vpop.f32.mrb[0].mxu0
      %v1310 = vadd.f32 %v312, %v1309
      %v1311 = vpop.f32.mrb[0].mxu0
      %1312 = vmatprep.mubr.f32.mxu0 0.0
      %1313 = vmatmul.mubr.f32.gmra.mrb[0].mxu0 %v643
      %v1314 = vpop.f32.mrb[0].mxu0
      %v1315 = vadd.f32 %v312, %v1314
      %v1316 = vpop.f32.mrb[0].mxu0
      %1317 = vmatprep.mubr.f32.mxu0 0.0
      %1318 = vmatmul.mubr.f32.gmra.mrb[0].mxu0 %v646
      %v1319 = vpop.f32.mrb[0].mxu0
      %v1320 = vadd.f32 %v312, %v1319
      %v1321 = vpop.f32.mrb[0].mxu0
      %1322 = vmatprep.mubr.f32.mxu0 0.0
      %1323 = vmatmul.mubr.f32.gmra.mrb[0].mxu0 %v649
      %v1324 = vpop.f32.mrb[0].mxu0
      %v1325 = vadd.f32 %v312, %v1324
      %v1326 = vpop.f32.mrb[0].mxu0
      %1327 = vmatprep.mubr.f32.mxu0 0.0
      %1328 = vmatmul.mubr.f32.gmra.mrb[0].mxu0 %v652
      %v1329 = vpop.f32.mrb[0].mxu0
      %v1330 = vadd.f32 %v312, %v1329
      %v1331 = vpop.f32.mrb[0].mxu0
      %1332 = vmatprep.mubr.f32.mxu0 0.0
      %1333 = vmatmul.mubr.f32.gmra.mrb[0].mxu0 %v655
      %v1334 = vpop.f32.mrb[0].mxu0
      %v1335 = vadd.f32 %v312, %v1334
      %v1336 = vpop.f32.mrb[0].mxu0
      %1337 = vmatprep.mubr.f32.mxu0 0.0
      %1338 = vmatmul.mubr.f32.gmra.mrb[0].mxu0 %v658
      %v1339 = vpop.f32.mrb[0].mxu0
      %v1340 = vadd.f32 %v312, %v1339
      %v1341 = vpop.f32.mrb[0].mxu0
      %1342 = vmatprep.mubr.f32.mxu0 0.0
      %1343 = vmatmul.mubr.f32.gmra.mrb[0].mxu0 %v661
      %v1344 = vpop.f32.mrb[0].mxu0
      %v1345 = vadd.f32 %v312, %v1344
      %v1346 = vpop.f32.mrb[0].mxu0
      %1347 = vmatprep.mubr.f32.mxu0 0.0
      %1348 = vmatmul.mubr.f32.gmra.mrb[0].mxu0 %v664
      %v1349 = vpop.f32.mrb[0].mxu0
      %v1350 = vadd.f32 %v312, %v1349
      %v1351 = vpop.f32.mrb[0].mxu0
      %1352 = vmatprep.mubr.f32.mxu0 0.0
      %1353 = vmatmul.mubr.f32.gmra.mrb[0].mxu0 %v667
      %v1354 = vpop.f32.mrb[0].mxu0
      %v1355 = vadd.f32 %v312, %v1354
      %v1356 = vpop.f32.mrb[0].mxu0
      %1357 = vmatprep.mubr.f32.mxu0 0.0
      %1358 = vmatmul.mubr.f32.gmra.mrb[0].mxu0 %v670
      %v1359 = vpop.f32.mrb[0].mxu0
      %v1360 = vadd.f32 %v312, %v1359
      %v1361 = vpop.f32.mrb[0].mxu0
      %1362 = vmatprep.mubr.f32.mxu0 0.0
      %1363 = vmatmul.mubr.f32.gmra.mrb[0].mxu0 %v673
      %v1364 = vpop.f32.mrb[0].mxu0
      %v1365 = vadd.f32 %v312, %v1364
      %v1366 = vpop.f32.mrb[0].mxu0
      %1367 = vmatprep.mubr.f32.mxu0 0.0
      %1368 = vmatmul.mubr.f32.gmra.mrb[0].mxu0 %v676
      %v1369 = vpop.f32.mrb[0].mxu0
      %v1370 = vadd.f32 %v312, %v1369
      %v1371 = vpop.f32.mrb[0].mxu0
      %1372 = vmatprep.mubr.f32.mxu0 0.0
      %1373 = vmatmul.mubr.f32.gmra.mrb[0].mxu0 %v679
      %v1374 = vpop.f32.mrb[0].mxu0
      %v1375 = vadd.f32 %v312, %v1374
      %v1376 = vpop.f32.mrb[0].mxu0
      %1377 = vmatprep.mubr.f32.mxu0 0.0
      %1378 = vmatmul.mubr.f32.gmra.mrb[0].mxu0 %v682
      %v1379 = vpop.f32.mrb[0].mxu0
      %v1380 = vadd.f32 %v312, %v1379
      %v1381 = vpop.f32.mrb[0].mxu0
      %1382 = vmatprep.mubr.f32.mxu0 0.0
      %1383 = vmatmul.mubr.f32.gmra.mrb[0].mxu0 %v685
      %v1384 = vpop.f32.mrb[0].mxu0
      %v1385 = vadd.f32 %v312, %v1384
      %v1386 = vpop.f32.mrb[0].mxu0
      %1387 = vmatprep.mubr.f32.mxu0 0.0
      %1388 = vmatmul.mubr.f32.gmra.mrb[0].mxu0 %v688
      %v1389 = vpop.f32.mrb[0].mxu0
      %v1390 = vadd.f32 %v312, %v1389
      %v1391 = vpop.f32.mrb[0].mxu0
      %1392 = vmatprep.mubr.f32.mxu0 0.0
      %1393 = vmatmul.mubr.f32.gmra.mrb[0].mxu0 %v691
      %v1394 = vpop.f32.mrb[0].mxu0
      %v1395 = vadd.f32 %v312, %v1394
      %v1396 = vpop.f32.mrb[0].mxu0
      %1397 = vmatprep.mubr.f32.mxu0 0.0
      %1398 = vmatmul.mubr.f32.gmra.mrb[0].mxu0 %v694
      %v1399 = vpop.f32.mrb[0].mxu0
      %v1400 = vadd.f32 %v312, %v1399
      %v1401 = vpop.f32.mrb[0].mxu0
      %1402 = vmatprep.mubr.f32.mxu0 0.0
      %1403 = vmatmul.mubr.f32.gmra.mrb[0].mxu0 %v697
      %v1404 = vpop.f32.mrb[0].mxu0
      %v1405 = vadd.f32 %v312, %v1404
      %v1406 = vpop.f32.mrb[0].mxu0
      %1407 = vdwg.mxu0
      %v1408 = vmax.f32 %v770, 0.0
      %v1409 = vmax.f32 %v775, 0.0
      %v1410 = vmax.f32 %v780, 0.0
      %v1411 = vmax.f32 %v785, 0.0
      %v1412 = vmax.f32 %v790, 0.0
      %v1413 = vmax.f32 %v795, 0.0
      %v1414 = vmax.f32 %v800, 0.0
      %v1415 = vmax.f32 %v805, 0.0
      %v1416 = vmax.f32 %v810, 0.0
      %v1417 = vmax.f32 %v815, 0.0
      %v1418 = vmax.f32 %v820, 0.0
      %v1419 = vmax.f32 %v825, 0.0
      %v1420 = vmax.f32 %v830, 0.0
      %v1421 = vmax.f32 %v835, 0.0
      %v1422 = vmax.f32 %v840, 0.0
      %v1423 = vmax.f32 %v845, 0.0
      %v1424 = vmax.f32 %v850, 0.0
      %v1425 = vmax.f32 %v855, 0.0
      %v1426 = vmax.f32 %v860, 0.0
      %v1427 = vmax.f32 %v865, 0.0
      %v1428 = vmax.f32 %v870, 0.0
      %v1429 = vmax.f32 %v875, 0.0
      %v1430 = vmax.f32 %v880, 0.0
      %v1431 = vmax.f32 %v885, 0.0
      %v1432 = vmax.f32 %v890, 0.0
      %v1433 = vmax.f32 %v895, 0.0
      %v1434 = vmax.f32 %v900, 0.0
      %v1435 = vmax.f32 %v905, 0.0
      %v1436 = vmax.f32 %v910, 0.0
      %v1437 = vmax.f32 %v915, 0.0
      %v1438 = vmax.f32 %v920, 0.0
      %v1439 = vmax.f32 %v925, 0.0
      %v1440 = vmax.f32 %v930, 0.0
      %v1441 = vmax.f32 %v935, 0.0
      %v1442 = vmax.f32 %v940, 0.0
      %v1443 = vmax.f32 %v945, 0.0
      %v1444 = vmax.f32 %v950, 0.0
      %v1445 = vmax.f32 %v955, 0.0
      %v1446 = vmax.f32 %v960, 0.0
      %v1447 = vmax.f32 %v965, 0.0
      %v1448 = vmax.f32 %v970, 0.0
      %v1449 = vmax.f32 %v975, 0.0
      %v1450 = vmax.f32 %v980, 0.0
      %v1451 = vmax.f32 %v985, 0.0
      %v1452 = vmax.f32 %v990, 0.0
      %v1453 = vmax.f32 %v995, 0.0
      %v1454 = vmax.f32 %v1000, 0.0
      %v1455 = vmax.f32 %v1005, 0.0
      %v1456 = vmax.f32 %v1010, 0.0
      %v1457 = vmax.f32 %v1015, 0.0
      %v1458 = vmax.f32 %v1020, 0.0
      %v1459 = vmax.f32 %v1025, 0.0
      %v1460 = vmax.f32 %v1030, 0.0
      %v1461 = vmax.f32 %v1035, 0.0
      %v1462 = vmax.f32 %v1040, 0.0
      %v1463 = vmax.f32 %v1045, 0.0
      %v1464 = vmax.f32 %v1050, 0.0
      %v1465 = vmax.f32 %v1055, 0.0
      %v1466 = vmax.f32 %v1060, 0.0
      %v1467 = vmax.f32 %v1065, 0.0
      %v1468 = vmax.f32 %v1070, 0.0
      %v1469 = vmax.f32 %v1075, 0.0
      %v1470 = vmax.f32 %v1080, 0.0
      %v1471 = vmax.f32 %v1085, 0.0
      %v1472 = vmax.f32 %v1090, 0.0
      %v1473 = vmax.f32 %v1095, 0.0
      %v1474 = vmax.f32 %v1100, 0.0
      %v1475 = vmax.f32 %v1105, 0.0
      %v1476 = vmax.f32 %v1110, 0.0
      %v1477 = vmax.f32 %v1115, 0.0
      %v1478 = vmax.f32 %v1120, 0.0
      %v1479 = vmax.f32 %v1125, 0.0
      %v1480 = vmax.f32 %v1130, 0.0
      %v1481 = vmax.f32 %v1135, 0.0
      %v1482 = vmax.f32 %v1140, 0.0
      %v1483 = vmax.f32 %v1145, 0.0
      %v1484 = vmax.f32 %v1150, 0.0
      %v1485 = vmax.f32 %v1155, 0.0
      %v1486 = vmax.f32 %v1160, 0.0
      %v1487 = vmax.f32 %v1165, 0.0
      %v1488 = vmax.f32 %v1170, 0.0
      %v1489 = vmax.f32 %v1175, 0.0
      %v1490 = vmax.f32 %v1180, 0.0
      %v1491 = vmax.f32 %v1185, 0.0
      %v1492 = vmax.f32 %v1190, 0.0
      %v1493 = vmax.f32 %v1195, 0.0
      %v1494 = vmax.f32 %v1200, 0.0
      %v1495 = vmax.f32 %v1205, 0.0
      %v1496 = vmax.f32 %v1210, 0.0
      %v1497 = vmax.f32 %v1215, 0.0
      %v1498 = vmax.f32 %v1220, 0.0
      %v1499 = vmax.f32 %v1225, 0.0
      %v1500 = vmax.f32 %v1230, 0.0
      %v1501 = vmax.f32 %v1235, 0.0
      %v1502 = vmax.f32 %v1240, 0.0
      %v1503 = vmax.f32 %v1245, 0.0
      %v1504 = vmax.f32 %v1250, 0.0
      %v1505 = vmax.f32 %v1255, 0.0
      %v1506 = vmax.f32 %v1260, 0.0
      %v1507 = vmax.f32 %v1265, 0.0
      %v1508 = vmax.f32 %v1270, 0.0
      %v1509 = vmax.f32 %v1275, 0.0
      %v1510 = vmax.f32 %v1280, 0.0
      %v1511 = vmax.f32 %v1285, 0.0
      %v1512 = vmax.f32 %v1290, 0.0
      %v1513 = vmax.f32 %v1295, 0.0
      %v1514 = vmax.f32 %v1300, 0.0
      %v1515 = vmax.f32 %v1305, 0.0
      %v1516 = vmax.f32 %v1310, 0.0
      %v1517 = vmax.f32 %v1315, 0.0
      %v1518 = vmax.f32 %v1320, 0.0
      %v1519 = vmax.f32 %v1325, 0.0
      %v1520 = vmax.f32 %v1330, 0.0
      %v1521 = vmax.f32 %v1335, 0.0
      %v1522 = vmax.f32 %v1340, 0.0
      %v1523 = vmax.f32 %v1345, 0.0
      %v1524 = vmax.f32 %v1350, 0.0
      %v1525 = vmax.f32 %v1355, 0.0
      %v1526 = vmax.f32 %v1360, 0.0
      %v1527 = vmax.f32 %v1365, 0.0
      %v1528 = vmax.f32 %v1370, 0.0
      %v1529 = vmax.f32 %v1375, 0.0
      %v1530 = vmax.f32 %v1380, 0.0
      %v1531 = vmax.f32 %v1385, 0.0
      %v1532 = vmax.f32 %v1390, 0.0
      %v1533 = vmax.f32 %v1395, 0.0
      %v1534 = vmax.f32 %v1400, 0.0
      %v1535 = vmax.f32 %v1405, 0.0
      %vm1536 = vcmask 64512
      %1537 = vst.msk [vmem:[%s172] sm:$0xff] %vm1536, %v1408
      %1538 = vst.msk [vmem:[%s172 + $0x8] sm:$0xff] %vm1536, %v1409
      %1539 = vst.msk [vmem:[%s172 + $0x10] sm:$0xff] %vm1536, %v1410
      %1540 = vst.msk [vmem:[%s172 + $0x18] sm:$0xff] %vm1536, %v1411
      %1541 = vst.msk [vmem:[%s172 + $0x20] sm:$0xff] %vm1536, %v1412
      %1542 = vst.msk [vmem:[%s172 + $0x28] sm:$0xff] %vm1536, %v1413
      %1543 = vst.msk [vmem:[%s172 + $0x30] sm:$0xff] %vm1536, %v1414
      %1544 = vst.msk [vmem:[%s172 + $0x38] sm:$0xff] %vm1536, %v1415
      %1545 = vst.msk [vmem:[%s172 + $0x40] sm:$0xff] %vm1536, %v1416
      %1546 = vst.msk [vmem:[%s172 + $0x48] sm:$0xff] %vm1536, %v1417
      %1547 = vst.msk [vmem:[%s172 + $0x50] sm:$0xff] %vm1536, %v1418
      %1548 = vst.msk [vmem:[%s172 + $0x58] sm:$0xff] %vm1536, %v1419
      %1549 = vst.msk [vmem:[%s172 + $0x60] sm:$0xff] %vm1536, %v1420
      %1550 = vst.msk [vmem:[%s172 + $0x68] sm:$0xff] %vm1536, %v1421
      %1551 = vst.msk [vmem:[%s172 + $0x70] sm:$0xff] %vm1536, %v1422
      %1552 = vst.msk [vmem:[%s172 + $0x78] sm:$0xff] %vm1536, %v1423
      %1553 = vst.msk [vmem:[%s172 + $0x80] sm:$0xff] %vm1536, %v1424
      %1554 = vst.msk [vmem:[%s172 + $0x88] sm:$0xff] %vm1536, %v1425
      %1555 = vst.msk [vmem:[%s172 + $0x90] sm:$0xff] %vm1536, %v1426
      %1556 = vst.msk [vmem:[%s172 + $0x98] sm:$0xff] %vm1536, %v1427
      %1557 = vst.msk [vmem:[%s172 + $0xa0] sm:$0xff] %vm1536, %v1428
      %1558 = vst.msk [vmem:[%s172 + $0xa8] sm:$0xff] %vm1536, %v1429
      %1559 = vst.msk [vmem:[%s172 + $0xb0] sm:$0xff] %vm1536, %v1430
      %1560 = vst.msk [vmem:[%s172 + $0xb8] sm:$0xff] %vm1536, %v1431
      %1561 = vst.msk [vmem:[%s172 + $0xc0] sm:$0xff] %vm1536, %v1432
      %1562 = vst.msk [vmem:[%s172 + $0xc8] sm:$0xff] %vm1536, %v1433
      %1563 = vst.msk [vmem:[%s172 + $0xd0] sm:$0xff] %vm1536, %v1434
      %1564 = vst.msk [vmem:[%s172 + $0xd8] sm:$0xff] %vm1536, %v1435
      %1565 = vst.msk [vmem:[%s172 + $0xe0] sm:$0xff] %vm1536, %v1436
      %1566 = vst.msk [vmem:[%s172 + $0xe8] sm:$0xff] %vm1536, %v1437
      %1567 = vst.msk [vmem:[%s172 + $0xf0] sm:$0xff] %vm1536, %v1438
      %1568 = vst.msk [vmem:[%s172 + $0xf8] sm:$0xff] %vm1536, %v1439
      %1569 = vst.msk [vmem:[%s172 + $0x100] sm:$0xff] %vm1536, %v1440
      %1570 = vst.msk [vmem:[%s172 + $0x108] sm:$0xff] %vm1536, %v1441
      %1571 = vst.msk [vmem:[%s172 + $0x110] sm:$0xff] %vm1536, %v1442
      %1572 = vst.msk [vmem:[%s172 + $0x118] sm:$0xff] %vm1536, %v1443
      %1573 = vst.msk [vmem:[%s172 + $0x120] sm:$0xff] %vm1536, %v1444
      %1574 = vst.msk [vmem:[%s172 + $0x128] sm:$0xff] %vm1536, %v1445
      %1575 = vst.msk [vmem:[%s172 + $0x130] sm:$0xff] %vm1536, %v1446
      %1576 = vst.msk [vmem:[%s172 + $0x138] sm:$0xff] %vm1536, %v1447
      %1577 = vst.msk [vmem:[%s172 + $0x140] sm:$0xff] %vm1536, %v1448
      %1578 = vst.msk [vmem:[%s172 + $0x148] sm:$0xff] %vm1536, %v1449
      %1579 = vst.msk [vmem:[%s172 + $0x150] sm:$0xff] %vm1536, %v1450
      %1580 = vst.msk [vmem:[%s172 + $0x158] sm:$0xff] %vm1536, %v1451
      %1581 = vst.msk [vmem:[%s172 + $0x160] sm:$0xff] %vm1536, %v1452
      %1582 = vst.msk [vmem:[%s172 + $0x168] sm:$0xff] %vm1536, %v1453
      %1583 = vst.msk [vmem:[%s172 + $0x170] sm:$0xff] %vm1536, %v1454
      %1584 = vst.msk [vmem:[%s172 + $0x178] sm:$0xff] %vm1536, %v1455
      %1585 = vst.msk [vmem:[%s172 + $0x180] sm:$0xff] %vm1536, %v1456
      %1586 = vst.msk [vmem:[%s172 + $0x188] sm:$0xff] %vm1536, %v1457
      %1587 = vst.msk [vmem:[%s172 + $0x190] sm:$0xff] %vm1536, %v1458
      %1588 = vst.msk [vmem:[%s172 + $0x198] sm:$0xff] %vm1536, %v1459
      %1589 = vst.msk [vmem:[%s172 + $0x1a0] sm:$0xff] %vm1536, %v1460
      %1590 = vst.msk [vmem:[%s172 + $0x1a8] sm:$0xff] %vm1536, %v1461
      %1591 = vst.msk [vmem:[%s172 + $0x1b0] sm:$0xff] %vm1536, %v1462
      %1592 = vst.msk [vmem:[%s172 + $0x1b8] sm:$0xff] %vm1536, %v1463
      %1593 = vst.msk [vmem:[%s172 + $0x1c0] sm:$0xff] %vm1536, %v1464
      %1594 = vst.msk [vmem:[%s172 + $0x1c8] sm:$0xff] %vm1536, %v1465
      %1595 = vst.msk [vmem:[%s172 + $0x1d0] sm:$0xff] %vm1536, %v1466
      %1596 = vst.msk [vmem:[%s172 + $0x1d8] sm:$0xff] %vm1536, %v1467
      %1597 = vst.msk [vmem:[%s172 + $0x1e0] sm:$0xff] %vm1536, %v1468
      %1598 = vst.msk [vmem:[%s172 + $0x1e8] sm:$0xff] %vm1536, %v1469
      %1599 = vst.msk [vmem:[%s172 + $0x1f0] sm:$0xff] %vm1536, %v1470
      %1600 = vst.msk [vmem:[%s172 + $0x1f8] sm:$0xff] %vm1536, %v1471
      %1601 = vst.msk [vmem:[%s172 + $0x200] sm:$0xff] %vm1536, %v1472
      %1602 = vst.msk [vmem:[%s172 + $0x208] sm:$0xff] %vm1536, %v1473
      %1603 = vst.msk [vmem:[%s172 + $0x210] sm:$0xff] %vm1536, %v1474
      %1604 = vst.msk [vmem:[%s172 + $0x218] sm:$0xff] %vm1536, %v1475
      %1605 = vst.msk [vmem:[%s172 + $0x220] sm:$0xff] %vm1536, %v1476
      %1606 = vst.msk [vmem:[%s172 + $0x228] sm:$0xff] %vm1536, %v1477
      %1607 = vst.msk [vmem:[%s172 + $0x230] sm:$0xff] %vm1536, %v1478
      %1608 = vst.msk [vmem:[%s172 + $0x238] sm:$0xff] %vm1536, %v1479
      %1609 = vst.msk [vmem:[%s172 + $0x240] sm:$0xff] %vm1536, %v1480
      %1610 = vst.msk [vmem:[%s172 + $0x248] sm:$0xff] %vm1536, %v1481
      %1611 = vst.msk [vmem:[%s172 + $0x250] sm:$0xff] %vm1536, %v1482
      %1612 = vst.msk [vmem:[%s172 + $0x258] sm:$0xff] %vm1536, %v1483
      %1613 = vst.msk [vmem:[%s172 + $0x260] sm:$0xff] %vm1536, %v1484
      %1614 = vst.msk [vmem:[%s172 + $0x268] sm:$0xff] %vm1536, %v1485
      %1615 = vst.msk [vmem:[%s172 + $0x270] sm:$0xff] %vm1536, %v1486
      %1616 = vst.msk [vmem:[%s172 + $0x278] sm:$0xff] %vm1536, %v1487
      %1617 = vst.msk [vmem:[%s172 + $0x280] sm:$0xff] %vm1536, %v1488
      %1618 = vst.msk [vmem:[%s172 + $0x288] sm:$0xff] %vm1536, %v1489
      %1619 = vst.msk [vmem:[%s172 + $0x290] sm:$0xff] %vm1536, %v1490
      %1620 = vst.msk [vmem:[%s172 + $0x298] sm:$0xff] %vm1536, %v1491
      %1621 = vst.msk [vmem:[%s172 + $0x2a0] sm:$0xff] %vm1536, %v1492
      %1622 = vst.msk [vmem:[%s172 + $0x2a8] sm:$0xff] %vm1536, %v1493
      %1623 = vst.msk [vmem:[%s172 + $0x2b0] sm:$0xff] %vm1536, %v1494
      %1624 = vst.msk [vmem:[%s172 + $0x2b8] sm:$0xff] %vm1536, %v1495
      %1625 = vst.msk [vmem:[%s172 + $0x2c0] sm:$0xff] %vm1536, %v1496
      %1626 = vst.msk [vmem:[%s172 + $0x2c8] sm:$0xff] %vm1536, %v1497
      %1627 = vst.msk [vmem:[%s172 + $0x2d0] sm:$0xff] %vm1536, %v1498
      %1628 = vst.msk [vmem:[%s172 + $0x2d8] sm:$0xff] %vm1536, %v1499
      %1629 = vst.msk [vmem:[%s172 + $0x2e0] sm:$0xff] %vm1536, %v1500
      %1630 = vst.msk [vmem:[%s172 + $0x2e8] sm:$0xff] %vm1536, %v1501
      %1631 = vst.msk [vmem:[%s172 + $0x2f0] sm:$0xff] %vm1536, %v1502
      %1632 = vst.msk [vmem:[%s172 + $0x2f8] sm:$0xff] %vm1536, %v1503
      %1633 = vst.msk [vmem:[%s172 + $0x300] sm:$0xff] %vm1536, %v1504
      %1634 = vst.msk [vmem:[%s172 + $0x308] sm:$0xff] %vm1536, %v1505
      %1635 = vst.msk [vmem:[%s172 + $0x310] sm:$0xff] %vm1536, %v1506
      %1636 = vst.msk [vmem:[%s172 + $0x318] sm:$0xff] %vm1536, %v1507
      %1637 = vst.msk [vmem:[%s172 + $0x320] sm:$0xff] %vm1536, %v1508
      %1638 = vst.msk [vmem:[%s172 + $0x328] sm:$0xff] %vm1536, %v1509
      %1639 = vst.msk [vmem:[%s172 + $0x330] sm:$0xff] %vm1536, %v1510
      %1640 = vst.msk [vmem:[%s172 + $0x338] sm:$0xff] %vm1536, %v1511
      %1641 = vst.msk [vmem:[%s172 + $0x340] sm:$0xff] %vm1536, %v1512
      %1642 = vst.msk [vmem:[%s172 + $0x348] sm:$0xff] %vm1536, %v1513
      %1643 = vst.msk [vmem:[%s172 + $0x350] sm:$0xff] %vm1536, %v1514
      %1644 = vst.msk [vmem:[%s172 + $0x358] sm:$0xff] %vm1536, %v1515
      %1645 = vst.msk [vmem:[%s172 + $0x360] sm:$0xff] %vm1536, %v1516
      %1646 = vst.msk [vmem:[%s172 + $0x368] sm:$0xff] %vm1536, %v1517
      %1647 = vst.msk [vmem:[%s172 + $0x370] sm:$0xff] %vm1536, %v1518
      %1648 = vst.msk [vmem:[%s172 + $0x378] sm:$0xff] %vm1536, %v1519
      %1649 = vst.msk [vmem:[%s172 + $0x380] sm:$0xff] %vm1536, %v1520
      %1650 = vst.msk [vmem:[%s172 + $0x388] sm:$0xff] %vm1536, %v1521
      %1651 = vst.msk [vmem:[%s172 + $0x390] sm:$0xff] %vm1536, %v1522
      %1652 = vst.msk [vmem:[%s172 + $0x398] sm:$0xff] %vm1536, %v1523
      %1653 = vst.msk [vmem:[%s172 + $0x3a0] sm:$0xff] %vm1536, %v1524
      %1654 = vst.msk [vmem:[%s172 + $0x3a8] sm:$0xff] %vm1536, %v1525
      %1655 = vst.msk [vmem:[%s172 + $0x3b0] sm:$0xff] %vm1536, %v1526
      %1656 = vst.msk [vmem:[%s172 + $0x3b8] sm:$0xff] %vm1536, %v1527
      %1657 = vst.msk [vmem:[%s172 + $0x3c0] sm:$0xff] %vm1536, %v1528
      %1658 = vst.msk [vmem:[%s172 + $0x3c8] sm:$0xff] %vm1536, %v1529
      %1659 = vst.msk [vmem:[%s172 + $0x3d0] sm:$0xff] %vm1536, %v1530
      %1660 = vst.msk [vmem:[%s172 + $0x3d8] sm:$0xff] %vm1536, %v1531
      %1661 = vst.msk [vmem:[%s172 + $0x3e0] sm:$0xff] %vm1536, %v1532
      %1662 = vst.msk [vmem:[%s172 + $0x3e8] sm:$0xff] %vm1536, %v1533
      %1663 = vst.msk [vmem:[%s172 + $0x3f0] sm:$0xff] %vm1536, %v1534
      %1664 = vst.msk [vmem:[%s172 + $0x3f8] sm:$0xff] %vm1536, %v1535
      %s1665 = smul.u32 128, %s14
      %p1666 = scmp.lt.s32.totalorder %s1665, 255
      %s1667 = scalar_select %p1666, %s1665, 255
      %s1668 = smul.addr %s1667, 8
      %s1669 = scalar_lea.vmem %s3, %s1668
      // Predicated region
      $region33: #{vgg_gru_forward.3} parent=31 // pred_check
        %p1670 = pneg %p100
      $region34: #{vgg_gru_forward.3} parent=31 // pred_check_branch
        %1672 = sbr.rel (%p1670) target = $region36
      $region35: #{vgg_gru_forward.3} parent=31 // pred_region
        %s1673 = smul.u32 128, %s14
      $region36: #{vgg_gru_forward.3} parent=31 // pred_fallthru
        _
    $region32: #{vgg_gru_forward.3} parent=5 // pred_fallthru
      _
    %p1674 = scmp.le.s32.totalorder 2, %s9
    // Predicated region
    $region37: #{vgg_gru_forward.3} parent=5 // pred_check
      %p1675 = pneg %p1674
    $region38: #{vgg_gru_forward.3} parent=5 // pred_check_branch
      %1677 = sbr.rel (%p1675) target = $region40
    $region39: #{vgg_gru_forward.3} parent=5 // pred_region
      %s1678 = ssub.s32 %s9, 2
      // Predicated region
      $region41: #{vgg_gru_forward.3} parent=39 // pred_check
        %p1679 = pneg %p106
      $region42: #{vgg_gru_forward.3} parent=39 // pred_check_branch
        %1681 = sbr.rel (%p1679) target = $region44
      $region43: #{vgg_gru_forward.3} parent=39 // pred_region
        %s1682 = smul.u32 128, %s15
        %p1683 = scmp.lt.s32.totalorder %s1682, 255
        %s1684 = scalar_select %p1683, %s1682, 255
        %s1685 = smul.addr %s1684, 8
        %s1686 = scalar_lea.vmem %s3, %s1685
      $region44: #{vgg_gru_forward.3} parent=39 // pred_fallthru
        _
    $region40: #{vgg_gru_forward.3} parent=5 // pred_fallthru
      _
  $region6: #{vgg_gru_forward.3} parent=0 // loop_footer
    %s13 = sadd.s32 1, %s9
  $region7: #{vgg_gru_forward.3} parent=0 // loop_footer_branch
    %8 = sbr.rel target = $region3
  $region8: #{vgg_gru_forward.3} parent=0 // loop_exit
    _

// kernel: vgg_gru_forward.4
$region0: #{vgg_gru_forward.4}
  #allocation0 [shape = 'u32[]', space=smem, size = 0x4, offset = 0x4, fixed_abs, tag = 'smem constant byte address 0x4 - core index']
  #allocation1 [shape = 'u32[144,128]{1,0:T(1,128)}', space=vmem, size = 0x12000, scoped, tag = 'internal scratch']
  #allocation2 [shape = 'f32[128,16]{1,0:T(8,128)}', space=vmem, size = 0x10000, scoped, tag = 'scratch operand']
  %s0 = inlined_call_operand.vmem [shape: f32[4,128,72], index: 0, kind: input, shape index: {}]
  %s1 = inlined_call_operand.vmem [shape: f32[72,16], index: 1, kind: input, shape index: {}]
  %s2 = inlined_call_operand.vmem [shape: f32[16,16], index: 2, kind: input, shape index: {}]
  %s3 = inlined_call_operand.vmem [shape: f32[1,16], index: 3, kind: input, shape index: {}]
  %s4 = inlined_call_operand.vmem [shape: f32[4,128,16], index: 4, kind: output, shape index: {}]
  %s5 = sld [smem:[#allocation0]]
  $region53: #{vgg_gru_forward.4} parent=0
    _
  %s7 = ssub.s32 1, %s5
  %s8 = scalar_select 0, %s7, %s5
  loop: start=0, step=1, limit=6
  $region2: #{vgg_gru_forward.4} parent=0 // loop_pre_header
    _
  $region3: #{vgg_gru_forward.4} parent=0 // loop_header
    %s10 = sphi 0, %s14
    %p11 = scmp.ge.s32.totalorder %s10, 6
    %s20 = sphi 0, %s22
    %s23 = sphi 0, %s20
    %s24 = sphi 0, %s23
    %s40 = sphi 0, %s24
    %s44 = sphi 0, %s44
    %s46 = sphi 0, %s44
    %s47 = sphi 0, %s46
    %s61 = sphi 0, %s47
    %s65 = sphi 0, %s65
    %s67 = sphi 0, %s65
    %s68 = sphi 0, %s67
    %s82 = sphi 0, %s68
    %s86 = sphi 0, %s86
    %s88 = sphi 0, %s86
    %s89 = sphi 0, %s88
    %s103 = sphi 0, %s89
    %s109 = sphi 0, %s111
    %s112 = sphi 0, %s109
    %s113 = sphi 0, %s112
    %s129 = sphi 0, %s113
  $region4: #{vgg_gru_forward.4} parent=0 // loop_header_branch
    %13 = sbr.rel (%p11) target = $region8
  $region5: #{vgg_gru_forward.4} parent=0 // loop_body
    %s15 = ssub.s32 %s10, 1
    %s16 = ssub.s32 %s10, 2
    %s17 = sadd.s32 %s10, 1
    %s18 = ssub.s32 %s10, %s17
    %p19 = scmp.eq.s32.totalorder %s18, 0
    %s21 = sadd.s32 %s20, 1
    %s22 = scalar_select %p19, %s20, %s21
    %p25 = pneg %p19
    %p26 = scmp.eq.s32.totalorder %s10, 3
    %p27 = por %p25, %p26
    %p28 = scmp.ne.s32.totalorder %s20, %s23
    %p29 = scmp.eq.s32.totalorder %s10, 0
    %p30 = por %p28, %p29
    %p31 = scmp.ne.s32.totalorder %s20, %s23
    %p32 = scmp.eq.s32.totalorder %s15, 3
    %p33 = por %p31, %p32
    %p34 = scmp.ne.s32.totalorder %s23, %s24
    %p35 = scmp.eq.s32.totalorder %s15, 0
    %p36 = por %p34, %p35
    %p37 = scmp.ne.s32.totalorder %s23, %s24
    %p38 = scmp.eq.s32.totalorder %s16, 3
    %p39 = por %p37, %p38
    %p41 = scmp.ne.s32.totalorder %s24, %s40
    %p42 = scmp.eq.s32.totalorder %s16, 0
    %p43 = por %p41, %p42
    %s45 = sadd.s32 %s44, 1
    %p48 = scmp.eq.s32.totalorder %s10, 3
    %p49 = scmp.ne.s32.totalorder %s44, %s46
    %p50 = scmp.eq.s32.totalorder %s10, 0
    %p51 = por %p49, %p50
    %p52 = scmp.ne.s32.totalorder %s44, %s46
    %p53 = scmp.eq.s32.totalorder %s15, 3
    %p54 = por %p52, %p53
    %p55 = scmp.ne.s32.totalorder %s46, %s47
    %p56 = scmp.eq.s32.totalorder %s15, 0
    %p57 = por %p55, %p56
    %p58 = scmp.ne.s32.totalorder %s46, %s47
    %p59 = scmp.eq.s32.totalorder %s16, 3
    %p60 = por %p58, %p59
    %p62 = scmp.ne.s32.totalorder %s47, %s61
    %p63 = scmp.eq.s32.totalorder %s16, 0
    %p64 = por %p62, %p63
    %s66 = sadd.s32 %s65, 1
    %p69 = scmp.eq.s32.totalorder %s10, 3
    %p70 = scmp.ne.s32.totalorder %s65, %s67
    %p71 = scmp.eq.s32.totalorder %s10, 0
    %p72 = por %p70, %p71
    %p73 = scmp.ne.s32.totalorder %s65, %s67
    %p74 = scmp.eq.s32.totalorder %s15, 3
    %p75 = por %p73, %p74
    %p76 = scmp.ne.s32.totalorder %s67, %s68
    %p77 = scmp.eq.s32.totalorder %s15, 0
    %p78 = por %p76, %p77
    %p79 = scmp.ne.s32.totalorder %s67, %s68
    %p80 = scmp.eq.s32.totalorder %s16, 3
    %p81 = por %p79, %p80
    %p83 = scmp.ne.s32.totalorder %s68, %s82
    %p84 = scmp.eq.s32.totalorder %s16, 0
    %p85 = por %p83, %p84
    %s87 = sadd.s32 %s86, 1
    %p90 = scmp.eq.s32.totalorder %s10, 3
    %p91 = scmp.ne.s32.totalorder %s86, %s88
    %p92 = scmp.eq.s32.totalorder %s10, 0
    %p93 = por %p91, %p92
    %p94 = scmp.ne.s32.totalorder %s86, %s88
    %p95 = scmp.eq.s32.totalorder %s15, 3
    %p96 = por %p94, %p95
    %p97 = scmp.ne.s32.totalorder %s88, %s89
    %p98 = scmp.eq.s32.totalorder %s15, 0
    %p99 = por %p97, %p98
    %p100 = scmp.ne.s32.totalorder %s88, %s89
    %p101 = scmp.eq.s32.totalorder %s16, 3
    %p102 = por %p100, %p101
    %p104 = scmp.ne.s32.totalorder %s89, %s103
    %p105 = scmp.eq.s32.totalorder %s16, 0
    %p106 = por %p104, %p105
    %s107 = ssub.s32 %s10, %s17
    %p108 = scmp.eq.s32.totalorder %s107, 0
    %s110 = sadd.s32 %s109, 1
    %s111 = scalar_select %p108, %s109, %s110
    %p114 = pneg %p108
    %p115 = scmp.eq.s32.totalorder %s10, 3
    %p116 = por %p114, %p115
    %p117 = scmp.ne.s32.totalorder %s109, %s112
    %p118 = scmp.eq.s32.totalorder %s10, 0
    %p119 = por %p117, %p118
    %p120 = scmp.ne.s32.totalorder %s109, %s112
    %p121 = scmp.eq.s32.totalorder %s15, 3
    %p122 = por %p120, %p121
    %p123 = scmp.ne.s32.totalorder %s112, %s113
    %p124 = scmp.eq.s32.totalorder %s15, 0
    %p125 = por %p123, %p124
    %p126 = scmp.ne.s32.totalorder %s112, %s113
    %p127 = scmp.eq.s32.totalorder %s16, 3
    %p128 = por %p126, %p127
    %p130 = scmp.ne.s32.totalorder %s113, %s129
    %p131 = scmp.eq.s32.totalorder %s16, 0
    %p132 = por %p130, %p131
    %p133 = scmp.le.s32.totalorder 1, %s10
    %p134 = scmp.lt.s32.totalorder %s10, 5
    %p135 = pnand %p133, %p134
    %p136 = pneg %p135
    // Predicated region
    $region9: #{vgg_gru_forward.4} parent=5 // pred_check
      _
    $region10: #{vgg_gru_forward.4} parent=5 // pred_check_branch
      %138 = sbr.rel (%p135) target = $region12
    $region11: #{vgg_gru_forward.4} parent=5 // pred_region
      %s139 = ssub.s32 %s10, 1
      // Predicated region
      $region13: #{vgg_gru_forward.4} parent=11 // pred_check
        %p140 = pneg %p57
      $region14: #{vgg_gru_forward.4} parent=11 // pred_check_branch
        %142 = sbr.rel (%p140) target = $region16
      $region15: #{vgg_gru_forward.4} parent=11 // pred_region
        _
      $region16: #{vgg_gru_forward.4} parent=11 // pred_fallthru
        _
      // Predicated region
      $region17: #{vgg_gru_forward.4} parent=11 // pred_check
        %p143 = pneg %p78
      $region18: #{vgg_gru_forward.4} parent=11 // pred_check_branch
        %145 = sbr.rel (%p143) target = $region20
      $region19: #{vgg_gru_forward.4} parent=11 // pred_region
        _
      $region20: #{vgg_gru_forward.4} parent=11 // pred_fallthru
        _
      // Predicated region
      $region21: #{vgg_gru_forward.4} parent=11 // pred_check
        %p146 = pneg %p99
      $region22: #{vgg_gru_forward.4} parent=11 // pred_check_branch
        %148 = sbr.rel (%p146) target = $region24
      $region23: #{vgg_gru_forward.4} parent=11 // pred_region
        _
      $region24: #{vgg_gru_forward.4} parent=11 // pred_fallthru
        _
    $region12: #{vgg_gru_forward.4} parent=5 // pred_fallthru
      _
    %p149 = scmp.lt.s32.totalorder %s10, 4
    // Predicated region
    $region25: #{vgg_gru_forward.4} parent=5 // pred_check
      %p150 = pneg %p149
    $region26: #{vgg_gru_forward.4} parent=5 // pred_check_branch
      %152 = sbr.rel (%p150) target = $region28
    $region27: #{vgg_gru_forward.4} parent=5 // pred_region
      // Predicated region
      $region29: #{vgg_gru_forward.4} parent=27 // pred_check
        %p153 = pneg %p30
      $region30: #{vgg_gru_forward.4} parent=27 // pred_check_branch
        %155 = sbr.rel (%p153) target = $region32
      $region31: #{vgg_gru_forward.4} parent=27 // pred_region
        %p156 = scmp.lt.s32.totalorder %s10, 3
        %s157 = scalar_select %p156, %s10, 3
        %s158 = smul.addr %s157, 16
        %s159 = smul.addr %s158, 8
        %s160 = scalar_lea.vmem %s0, %s159
      $region32: #{vgg_gru_forward.4} parent=27 // pred_fallthru
        _
    $region28: #{vgg_gru_forward.4} parent=5 // pred_fallthru
      _
    %p161 = scmp.le.s32.totalorder 1, %s10
    %p162 = scmp.lt.s32.totalorder %s10, 5
    %p163 = pnand %p161, %p162
    %p164 = pneg %p163
    // Predicated region
    $region33: #{vgg_gru_forward.4} parent=5 // pred_check
      _
    $region34: #{vgg_gru_forward.4} parent=5 // pred_check_branch
      %166 = sbr.rel (%p163) target = $region36
    $region35: #{vgg_gru_forward.4} parent=5 // pred_region
      %s167 = ssub.s32 %s10, 1
      %p168 = scmp.lt.s32.totalorder %s15, 3
      %s169 = scalar_select %p168, %s15, 3
      %s170 = smul.addr %s169, 16
      %s171 = smul.addr %s170, 8
      %s172 = scalar_lea.vmem %s0, %s171
      %p173 = pneg %p36
      %p174 = pneg %p33
      %p175 = pneg %p57
      %p176 = pneg %p54
      %p177 = pneg %p78
      %p178 = pneg %p75
      %p179 = pneg %p99
      %p180 = pneg %p96
      %p181 = pneg %p125
      %p182 = pneg %p122
      %p183 = scmp.lt.s32.totalorder %s15, 3
      %s184 = scalar_select %p183, %s15, 3
      %s185 = smul.addr %s184, 16
      %s186 = smul.addr %s185, 8
      %s187 = scalar_lea.vmem %s4, %s186
      %p188 = scmp.lt.s32.totalorder %s15, 3
      %s189 = scalar_select %p188, %s15, 3
      %s190 = smul.addr %s189, 16
      %s191 = smul.addr %s190, 8
      %s192 = scalar_lea.vmem %s0, %s191
      %p193 = scmp.lt.s32.totalorder %s15, 3
      %s194 = scalar_select %p193, %s15, 3
      %s195 = smul.addr %s194, 16
      %s196 = smul.addr %s195, 8
      %s197 = scalar_lea.vmem %s4, %s196
      %p198 = scmp.eq.s32.totalorder %s15, 0
      // Predicated region
      $region37: #{vgg_gru_forward.4} parent=35 // pred_check
        %p199 = pneg %p198
      $region38: #{vgg_gru_forward.4} parent=35 // pred_check_branch
        %201 = sbr.rel (%p199) target = $region40
      $region39: #{vgg_gru_forward.4} parent=35 // pred_region
        %vm202 = vcmask 130048
        %203 = vst.msk [vmem:[#allocation2] sm:$0xff] %vm202, 0.0
        %204 = vst.msk [vmem:[#allocation2 + $0x8] sm:$0xff] %vm202, 0.0
        %205 = vst.msk [vmem:[#allocation2 + $0x10] sm:$0xff] %vm202, 0.0
        %206 = vst.msk [vmem:[#allocation2 + $0x18] sm:$0xff] %vm202, 0.0
        %207 = vst.msk [vmem:[#allocation2 + $0x20] sm:$0xff] %vm202, 0.0
        %208 = vst.msk [vmem:[#allocation2 + $0x28] sm:$0xff] %vm202, 0.0
        %209 = vst.msk [vmem:[#allocation2 + $0x30] sm:$0xff] %vm202, 0.0
        %210 = vst.msk [vmem:[#allocation2 + $0x38] sm:$0xff] %vm202, 0.0
        %211 = vst.msk [vmem:[#allocation2 + $0x40] sm:$0xff] %vm202, 0.0
        %212 = vst.msk [vmem:[#allocation2 + $0x48] sm:$0xff] %vm202, 0.0
        %213 = vst.msk [vmem:[#allocation2 + $0x50] sm:$0xff] %vm202, 0.0
        %214 = vst.msk [vmem:[#allocation2 + $0x58] sm:$0xff] %vm202, 0.0
        %215 = vst.msk [vmem:[#allocation2 + $0x60] sm:$0xff] %vm202, 0.0
        %216 = vst.msk [vmem:[#allocation2 + $0x68] sm:$0xff] %vm202, 0.0
        %217 = vst.msk [vmem:[#allocation2 + $0x70] sm:$0xff] %vm202, 0.0
        %218 = vst.msk [vmem:[#allocation2 + $0x78] sm:$0xff] %vm202, 0.0
      $region40: #{vgg_gru_forward.4} parent=35 // pred_fallthru
        _
      %v219 = vld [vmem:[%s192] sm:$0xff]
      %v220 = vld [vmem:[%s192 + $0x8] sm:$0xff]
      %v221 = vld [vmem:[%s192 + $0x10] sm:$0xff]
      %v222 = vld [vmem:[%s192 + $0x18] sm:$0xff]
      %v223 = vld [vmem:[%s192 + $0x20] sm:$0xff]
      %v224 = vld [vmem:[%s192 + $0x28] sm:$0xff]
      %v225 = vld [vmem:[%s192 + $0x30] sm:$0xff]
      %v226 = vld [vmem:[%s192 + $0x38] sm:$0xff]
      %v227 = vld [vmem:[%s192 + $0x40] sm:$0xff]
      %v228 = vld [vmem:[%s192 + $0x48] sm:$0xff]
      %v229 = vld [vmem:[%s192 + $0x50] sm:$0xff]
      %v230 = vld [vmem:[%s192 + $0x58] sm:$0xff]
      %v231 = vld [vmem:[%s192 + $0x60] sm:$0xff]
      %v232 = vld [vmem:[%s192 + $0x68] sm:$0xff]
      %v233 = vld [vmem:[%s192 + $0x70] sm:$0xff]
      %v234 = vld [vmem:[%s192 + $0x78] sm:$0xff]
      %v235 = vld [vmem:[%s1] sm:$0xff]
      %v236 = vld [vmem:[%s1 + $0x8] sm:$0xff]
      %v237 = vld [vmem:[%s1 + $0x10] sm:$0xff]
      %v238 = vld [vmem:[%s1 + $0x18] sm:$0xff]
      %v239 = vld [vmem:[%s1 + $0x20] sm:$0xff]
      %v240 = vld [vmem:[%s1 + $0x28] sm:$0xff]
      %v241 = vld [vmem:[%s1 + $0x30] sm:$0xff]
      %v242 = vld [vmem:[%s1 + $0x38] sm:$0xff]
      %v243 = vld [vmem:[%s1 + $0x40] sm:$0xff]
      %v244 = vld [vmem:[#allocation2] sm:$0xff]
      %v245 = vld [vmem:[#allocation2 + $0x8] sm:$0xff]
      %v246 = vld [vmem:[#allocation2 + $0x10] sm:$0xff]
      %v247 = vld [vmem:[#allocation2 + $0x18] sm:$0xff]
      %v248 = vld [vmem:[#allocation2 + $0x20] sm:$0xff]
      %v249 = vld [vmem:[#allocation2 + $0x28] sm:$0xff]
      %v250 = vld [vmem:[#allocation2 + $0x30] sm:$0xff]
      %v251 = vld [vmem:[#allocation2 + $0x38] sm:$0xff]
      %v252 = vld [vmem:[#allocation2 + $0x40] sm:$0xff]
      %v253 = vld [vmem:[#allocation2 + $0x48] sm:$0xff]
      %v254 = vld [vmem:[#allocation2 + $0x50] sm:$0xff]
      %v255 = vld [vmem:[#allocation2 + $0x58] sm:$0xff]
      %v256 = vld [vmem:[#allocation2 + $0x60] sm:$0xff]
      %v257 = vld [vmem:[#allocation2 + $0x68] sm:$0xff]
      %v258 = vld [vmem:[#allocation2 + $0x70] sm:$0xff]
      %v259 = vld [vmem:[#allocation2 + $0x78] sm:$0xff]
      %v260 = vld [vmem:[%s2] sm:$0xff]
      %v261 = vld [vmem:[%s2 + $0x8] sm:$0xff]
      %vm262 = vcmask 130048
      %v264 = vsel %vm262, %v244, 0
      %v267 = vsel %vm262, %v245, 0
      %v270 = vsel %vm262, %v246, 0
      %v273 = vsel %vm262, %v247, 0
      %v276 = vsel %vm262, %v248, 0
      %v279 = vsel %vm262, %v249, 0
      %v282 = vsel %vm262, %v250, 0
      %v285 = vsel %vm262, %v251, 0
      %v288 = vsel %vm262, %v252, 0
      %v291 = vsel %vm262, %v253, 0
      %v294 = vsel %vm262, %v254, 0
      %v297 = vsel %vm262, %v255, 0
      %v300 = vsel %vm262, %v256, 0
      %v303 = vsel %vm262, %v257, 0
      %v306 = vsel %vm262, %v258, 0
      %v309 = vsel %vm262, %v259, 0
      %311 = vmatprep.subr.mxu0 0.0
      %312 = vmatpush1.msra.mxu0 %v260
      %313 = vmatprep.subr.mxu0 0.0
      %314 = vmatpush1.msra.mxu0 %v261
      %315 = vmatprep.subr.mxu0 0.0
      %316 = vmatpush1.msra.mxu0 0.0
      %317 = vmatprep.subr.mxu0 0.0
      %318 = vmatpush1.msra.mxu0 0.0
      %319 = vmatprep.subr.mxu0 0.0
      %320 = vmatpush1.msra.mxu0 0.0
      %321 = vmatprep.subr.mxu0 0.0
      %322 = vmatpush1.msra.mxu0 0.0
      %323 = vmatprep.subr.mxu0 0.0
      %324 = vmatpush1.msra.mxu0 0.0
      %325 = vmatprep.subr.mxu0 0.0
      %326 = vmatpush1.msra.mxu0 0.0
      %327 = vmatprep.subr.mxu0 0.0
      %328 = vmatpush1.msra.mxu0 0.0
      %329 = vmatprep.subr.mxu0 0.0
      %330 = vmatpush1.msra.mxu0 0.0
      %331 = vmatprep.subr.mxu0 0.0
      %332 = vmatpush1.msra.mxu0 0.0
      %333 = vmatprep.subr.mxu0 0.0
      %334 = vmatpush1.msra.mxu0 0.0
      %335 = vmatprep.subr.mxu0 0.0
      %336 = vmatpush1.msra.mxu0 0.0
      %337 = vmatprep.subr.mxu0 0.0
      %338 = vmatpush1.msra.mxu0 0.0
      %339 = vmatprep.subr.mxu0 0.0
      %340 = vmatpush1.msra.mxu0 0.0
      %341 = vmatprep.subr.mxu0 0.0
      %342 = vmatpush1.msra.mxu0 0.0
      %343 = vmatprep.subr.mxu0 0.0
      %344 = vmatpush1.msra.mxu0 0.0
      %345 = vmatprep.subr.mxu0 0.0
      %346 = vmatpush1.msra.mxu0 0.0
      %347 = vmatprep.subr.mxu0 0.0
      %348 = vmatpush1.msra.mxu0 0.0
      %349 = vmatprep.subr.mxu0 0.0
      %350 = vmatpush1.msra.mxu0 0.0
      %351 = vmatprep.subr.mxu0 0.0
      %352 = vmatpush1.msra.mxu0 0.0
      %353 = vmatprep.subr.mxu0 0.0
      %354 = vmatpush1.msra.mxu0 0.0
      %355 = vmatprep.subr.mxu0 0.0
      %356 = vmatpush1.msra.mxu0 0.0
      %357 = vmatprep.subr.mxu0 0.0
      %358 = vmatpush1.msra.mxu0 0.0
      %359 = vmatprep.subr.mxu0 0.0
      %360 = vmatpush1.msra.mxu0 0.0
      %361 = vmatprep.subr.mxu0 0.0
      %362 = vmatpush1.msra.mxu0 0.0
      %363 = vmatprep.subr.mxu0 0.0
      %364 = vmatpush1.msra.mxu0 0.0
      %365 = vmatprep.subr.mxu0 0.0
      %366 = vmatpush1.msra.mxu0 0.0
      %367 = vmatprep.subr.mxu0 0.0
      %368 = vmatpush1.msra.mxu0 0.0
      %369 = vmatprep.subr.mxu0 0.0
      %370 = vmatpush1.msra.mxu0 0.0
      %371 = vmatprep.subr.mxu0 0.0
      %372 = vmatpush1.msra.mxu0 0.0
      %373 = vmatprep.subr.mxu0 0.0
      %374 = vmatpush1.msra.mxu0 0.0
      %375 = vmatprep.mubr.f32.mxu0 0.0
      %376 = vmatmul.mubr.f32.gmra.mrb[0].mxu0 %v264
      %v377 = vpop.f32.mrb[0].mxu0
      %v378 = vadd.f32 0.0, %v377
      %v379 = vpop.f32.mrb[0].mxu0
      %380 = vmatprep.mubr.f32.mxu0 0.0
      %381 = vmatmul.mubr.f32.gmra.mrb[0].mxu0 %v267
      %v382 = vpop.f32.mrb[0].mxu0
      %v383 = vadd.f32 0.0, %v382
      %v384 = vpop.f32.mrb[0].mxu0
      %385 = vmatprep.mubr.f32.mxu0 0.0
      %386 = vmatmul.mubr.f32.gmra.mrb[0].mxu0 %v270
      %v387 = vpop.f32.mrb[0].mxu0
      %v388 = vadd.f32 0.0, %v387
      %v389 = vpop.f32.mrb[0].mxu0
      %390 = vmatprep.mubr.f32.mxu0 0.0
      %391 = vmatmul.mubr.f32.gmra.mrb[0].mxu0 %v273
      %v392 = vpop.f32.mrb[0].mxu0
      %v393 = vadd.f32 0.0, %v392
      %v394 = vpop.f32.mrb[0].mxu0
      %395 = vmatprep.mubr.f32.mxu0 0.0
      %396 = vmatmul.mubr.f32.gmra.mrb[0].mxu0 %v276
      %v397 = vpop.f32.mrb[0].mxu0
      %v398 = vadd.f32 0.0, %v397
      %v399 = vpop.f32.mrb[0].mxu0
      %400 = vmatprep.mubr.f32.mxu0 0.0
      %401 = vmatmul.mubr.f32.gmra.mrb[0].mxu0 %v279
      %v402 = vpop.f32.mrb[0].mxu0
      %v403 = vadd.f32 0.0, %v402
      %v404 = vpop.f32.mrb[0].mxu0
      %405 = vmatprep.mubr.f32.mxu0 0.0
      %406 = vmatmul.mubr.f32.gmra.mrb[0].mxu0 %v282
      %v407 = vpop.f32.mrb[0].mxu0
      %v408 = vadd.f32 0.0, %v407
      %v409 = vpop.f32.mrb[0].mxu0
      %410 = vmatprep.mubr.f32.mxu0 0.0
      %411 = vmatmul.mubr.f32.gmra.mrb[0].mxu0 %v285
      %v412 = vpop.f32.mrb[0].mxu0
      %v413 = vadd.f32 0.0, %v412
      %v414 = vpop.f32.mrb[0].mxu0
      %415 = vmatprep.mubr.f32.mxu0 0.0
      %416 = vmatmul.mubr.f32.gmra.mrb[0].mxu0 %v288
      %v417 = vpop.f32.mrb[0].mxu0
      %v418 = vadd.f32 0.0, %v417
      %v419 = vpop.f32.mrb[0].mxu0
      %420 = vmatprep.mubr.f32.mxu0 0.0
      %421 = vmatmul.mubr.f32.gmra.mrb[0].mxu0 %v291
      %v422 = vpop.f32.mrb[0].mxu0
      %v423 = vadd.f32 0.0, %v422
      %v424 = vpop.f32.mrb[0].mxu0
      %425 = vmatprep.mubr.f32.mxu0 0.0
      %426 = vmatmul.mubr.f32.gmra.mrb[0].mxu0 %v294
      %v427 = vpop.f32.mrb[0].mxu0
      %v428 = vadd.f32 0.0, %v427
      %v429 = vpop.f32.mrb[0].mxu0
      %430 = vmatprep.mubr.f32.mxu0 0.0
      %431 = vmatmul.mubr.f32.gmra.mrb[0].mxu0 %v297
      %v432 = vpop.f32.mrb[0].mxu0
      %v433 = vadd.f32 0.0, %v432
      %v434 = vpop.f32.mrb[0].mxu0
      %435 = vmatprep.mubr.f32.mxu0 0.0
      %436 = vmatmul.mubr.f32.gmra.mrb[0].mxu0 %v300
      %v437 = vpop.f32.mrb[0].mxu0
      %v438 = vadd.f32 0.0, %v437
      %v439 = vpop.f32.mrb[0].mxu0
      %440 = vmatprep.mubr.f32.mxu0 0.0
      %441 = vmatmul.mubr.f32.gmra.mrb[0].mxu0 %v303
      %v442 = vpop.f32.mrb[0].mxu0
      %v443 = vadd.f32 0.0, %v442
      %v444 = vpop.f32.mrb[0].mxu0
      %445 = vmatprep.mubr.f32.mxu0 0.0
      %446 = vmatmul.mubr.f32.gmra.mrb[0].mxu0 %v306
      %v447 = vpop.f32.mrb[0].mxu0
      %v448 = vadd.f32 0.0, %v447
      %v449 = vpop.f32.mrb[0].mxu0
      %450 = vmatprep.mubr.f32.mxu0 0.0
      %451 = vmatmul.mubr.f32.gmra.mrb[0].mxu0 %v309
      %v452 = vpop.f32.mrb[0].mxu0
      %v453 = vadd.f32 0.0, %v452
      %v454 = vpop.f32.mrb[0].mxu0
      %455 = vdwg.mxu0
      %vm456 = vcmask 588800
      %v458 = vsel %vm456, %v219, 0
      %v461 = vsel %vm456, %v220, 0
      %v464 = vsel %vm456, %v221, 0
      %v467 = vsel %vm456, %v222, 0
      %v470 = vsel %vm456, %v223, 0
      %v473 = vsel %vm456, %v224, 0
      %v476 = vsel %vm456, %v225, 0
      %v479 = vsel %vm456, %v226, 0
      %v482 = vsel %vm456, %v227, 0
      %v485 = vsel %vm456, %v228, 0
      %v488 = vsel %vm456, %v229, 0
      %v491 = vsel %vm456, %v230, 0
      %v494 = vsel %vm456, %v231, 0
      %v497 = vsel %vm456, %v232, 0
      %v500 = vsel %vm456, %v233, 0
      %v503 = vsel %vm456, %v234, 0
      %505 = vmatprep.subr.mxu0 0.0
      %506 = vmatpush1.msra.mxu0 %v235
      %507 = vmatprep.subr.mxu0 0.0
      %508 = vmatpush1.msra.mxu0 %v236
      %509 = vmatprep.subr.mxu0 0.0
      %510 = vmatpush1.msra.mxu0 %v237
      %511 = vmatprep.subr.mxu0 0.0
      %512 = vmatpush1.msra.mxu0 %v238
      %513 = vmatprep.subr.mxu0 0.0
      %514 = vmatpush1.msra.mxu0 %v239
      %515 = vmatprep.subr.mxu0 0.0
      %516 = vmatpush1.msra.mxu0 %v240
      %517 = vmatprep.subr.mxu0 0.0
      %518 = vmatpush1.msra.mxu0 %v241
      %519 = vmatprep.subr.mxu0 0.0
      %520 = vmatpush1.msra.mxu0 %v242
      %521 = vmatprep.subr.mxu0 0.0
      %522 = vmatpush1.msra.mxu0 %v243
      %523 = vmatprep.subr.mxu0 0.0
      %524 = vmatpush1.msra.mxu0 0.0
      %525 = vmatprep.subr.mxu0 0.0
      %526 = vmatpush1.msra.mxu0 0.0
      %527 = vmatprep.subr.mxu0 0.0
      %528 = vmatpush1.msra.mxu0 0.0
      %529 = vmatprep.subr.mxu0 0.0
      %530 = vmatpush1.msra.mxu0 0.0
      %531 = vmatprep.subr.mxu0 0.0
      %532 = vmatpush1.msra.mxu0 0.0
      %533 = vmatprep.subr.mxu0 0.0
      %534 = vmatpush1.msra.mxu0 0.0
      %535 = vmatprep.subr.mxu0 0.0
      %536 = vmatpush1.msra.mxu0 0.0
      %537 = vmatprep.subr.mxu0 0.0
      %538 = vmatpush1.msra.mxu0 0.0
      %539 = vmatprep.subr.mxu0 0.0
      %540 = vmatpush1.msra.mxu0 0.0
      %541 = vmatprep.subr.mxu0 0.0
      %542 = vmatpush1.msra.mxu0 0.0
      %543 = vmatprep.subr.mxu0 0.0
      %544 = vmatpush1.msra.mxu0 0.0
      %545 = vmatprep.subr.mxu0 0.0
      %546 = vmatpush1.msra.mxu0 0.0
      %547 = vmatprep.subr.mxu0 0.0
      %548 = vmatpush1.msra.mxu0 0.0
      %549 = vmatprep.subr.mxu0 0.0
      %550 = vmatpush1.msra.mxu0 0.0
      %551 = vmatprep.subr.mxu0 0.0
      %552 = vmatpush1.msra.mxu0 0.0
      %553 = vmatprep.subr.mxu0 0.0
      %554 = vmatpush1.msra.mxu0 0.0
      %555 = vmatprep.subr.mxu0 0.0
      %556 = vmatpush1.msra.mxu0 0.0
      %557 = vmatprep.subr.mxu0 0.0
      %558 = vmatpush1.msra.mxu0 0.0
      %559 = vmatprep.subr.mxu0 0.0
      %560 = vmatpush1.msra.mxu0 0.0
      %561 = vmatprep.subr.mxu0 0.0
      %562 = vmatpush1.msra.mxu0 0.0
      %563 = vmatprep.subr.mxu0 0.0
      %564 = vmatpush1.msra.mxu0 0.0
      %565 = vmatprep.subr.mxu0 0.0
      %566 = vmatpush1.msra.mxu0 0.0
      %567 = vmatprep.subr.mxu0 0.0
      %568 = vmatpush1.msra.mxu0 0.0
      %569 = vmatprep.mubr.f32.mxu0 0.0
      %570 = vmatmul.mubr.f32.gmra.mrb[0].mxu0 %v458
      %v571 = vpop.f32.mrb[0].mxu0
      %v572 = vadd.f32 %v378, %v571
      %v573 = vpop.f32.mrb[0].mxu0
      %574 = vmatprep.mubr.f32.mxu0 0.0
      %575 = vmatmul.mubr.f32.gmra.mrb[0].mxu0 %v461
      %v576 = vpop.f32.mrb[0].mxu0
      %v577 = vadd.f32 %v383, %v576
      %v578 = vpop.f32.mrb[0].mxu0
      %579 = vmatprep.mubr.f32.mxu0 0.0
      %580 = vmatmul.mubr.f32.gmra.mrb[0].mxu0 %v464
      %v581 = vpop.f32.mrb[0].mxu0
      %v582 = vadd.f32 %v388, %v581
      %v583 = vpop.f32.mrb[0].mxu0
      %584 = vmatprep.mubr.f32.mxu0 0.0
      %585 = vmatmul.mubr.f32.gmra.mrb[0].mxu0 %v467
      %v586 = vpop.f32.mrb[0].mxu0
      %v587 = vadd.f32 %v393, %v586
      %v588 = vpop.f32.mrb[0].mxu0
      %589 = vmatprep.mubr.f32.mxu0 0.0
      %590 = vmatmul.mubr.f32.gmra.mrb[0].mxu0 %v470
      %v591 = vpop.f32.mrb[0].mxu0
      %v592 = vadd.f32 %v398, %v591
      %v593 = vpop.f32.mrb[0].mxu0
      %594 = vmatprep.mubr.f32.mxu0 0.0
      %595 = vmatmul.mubr.f32.gmra.mrb[0].mxu0 %v473
      %v596 = vpop.f32.mrb[0].mxu0
      %v597 = vadd.f32 %v403, %v596
      %v598 = vpop.f32.mrb[0].mxu0
      %599 = vmatprep.mubr.f32.mxu0 0.0
      %600 = vmatmul.mubr.f32.gmra.mrb[0].mxu0 %v476
      %v601 = vpop.f32.mrb[0].mxu0
      %v602 = vadd.f32 %v408, %v601
      %v603 = vpop.f32.mrb[0].mxu0
      %604 = vmatprep.mubr.f32.mxu0 0.0
      %605 = vmatmul.mubr.f32.gmra.mrb[0].mxu0 %v479
      %v606 = vpop.f32.mrb[0].mxu0
      %v607 = vadd.f32 %v413, %v606
      %v608 = vpop.f32.mrb[0].mxu0
      %609 = vmatprep.mubr.f32.mxu0 0.0
      %610 = vmatmul.mubr.f32.gmra.mrb[0].mxu0 %v482
      %v611 = vpop.f32.mrb[0].mxu0
      %v612 = vadd.f32 %v418, %v611
      %v613 = vpop.f32.mrb[0].mxu0
      %614 = vmatprep.mubr.f32.mxu0 0.0
      %615 = vmatmul.mubr.f32.gmra.mrb[0].mxu0 %v485
      %v616 = vpop.f32.mrb[0].mxu0
      %v617 = vadd.f32 %v423, %v616
      %v618 = vpop.f32.mrb[0].mxu0
      %619 = vmatprep.mubr.f32.mxu0 0.0
      %620 = vmatmul.mubr.f32.gmra.mrb[0].mxu0 %v488
      %v621 = vpop.f32.mrb[0].mxu0
      %v622 = vadd.f32 %v428, %v621
      %v623 = vpop.f32.mrb[0].mxu0
      %624 = vmatprep.mubr.f32.mxu0 0.0
      %625 = vmatmul.mubr.f32.gmra.mrb[0].mxu0 %v491
      %v626 = vpop.f32.mrb[0].mxu0
      %v627 = vadd.f32 %v433, %v626
      %v628 = vpop.f32.mrb[0].mxu0
      %629 = vmatprep.mubr.f32.mxu0 0.0
      %630 = vmatmul.mubr.f32.gmra.mrb[0].mxu0 %v494
      %v631 = vpop.f32.mrb[0].mxu0
      %v632 = vadd.f32 %v438, %v631
      %v633 = vpop.f32.mrb[0].mxu0
      %634 = vmatprep.mubr.f32.mxu0 0.0
      %635 = vmatmul.mubr.f32.gmra.mrb[0].mxu0 %v497
      %v636 = vpop.f32.mrb[0].mxu0
      %v637 = vadd.f32 %v443, %v636
      %v638 = vpop.f32.mrb[0].mxu0
      %639 = vmatprep.mubr.f32.mxu0 0.0
      %640 = vmatmul.mubr.f32.gmra.mrb[0].mxu0 %v500
      %v641 = vpop.f32.mrb[0].mxu0
      %v642 = vadd.f32 %v448, %v641
      %v643 = vpop.f32.mrb[0].mxu0
      %644 = vmatprep.mubr.f32.mxu0 0.0
      %645 = vmatmul.mubr.f32.gmra.mrb[0].mxu0 %v503
      %v646 = vpop.f32.mrb[0].mxu0
      %v647 = vadd.f32 %v453, %v646
      %v648 = vpop.f32.mrb[0].mxu0
      %649 = vdwg.mxu0
      %v650 = vld [vmem:[%s3] sm:$0x1]
      %v652 = vlaneseq
      %v653 = vshrl.u32 %v652, 7
      %v654 = vsub.s32 0, %v653
      %v655 = vrot.slane %v650, %v654
      %v657 = vadd.f32 %v572, %v655
      %v658 = vadd.f32 %v577, %v655
      %v659 = vadd.f32 %v582, %v655
      %v660 = vadd.f32 %v587, %v655
      %v661 = vadd.f32 %v592, %v655
      %v662 = vadd.f32 %v597, %v655
      %v663 = vadd.f32 %v602, %v655
      %v664 = vadd.f32 %v607, %v655
      %v665 = vadd.f32 %v612, %v655
      %v666 = vadd.f32 %v617, %v655
      %v667 = vadd.f32 %v622, %v655
      %v668 = vadd.f32 %v627, %v655
      %v669 = vadd.f32 %v632, %v655
      %v670 = vadd.f32 %v637, %v655
      %v671 = vadd.f32 %v642, %v655
      %v672 = vadd.f32 %v647, %v655
      %v673 = vmax.f32 %v657, 0.0
      %v674 = vmax.f32 %v658, 0.0
      %v675 = vmax.f32 %v659, 0.0
      %v676 = vmax.f32 %v660, 0.0
      %v677 = vmax.f32 %v661, 0.0
      %v678 = vmax.f32 %v662, 0.0
      %v679 = vmax.f32 %v663, 0.0
      %v680 = vmax.f32 %v664, 0.0
      %v681 = vmax.f32 %v665, 0.0
      %v682 = vmax.f32 %v666, 0.0
      %v683 = vmax.f32 %v667, 0.0
      %v684 = vmax.f32 %v668, 0.0
      %v685 = vmax.f32 %v669, 0.0
      %v686 = vmax.f32 %v670, 0.0
      %v687 = vmax.f32 %v671, 0.0
      %v688 = vmax.f32 %v672, 0.0
      %689 = vst.msk [vmem:[#allocation2] sm:$0xff] %vm262, %v673
      %690 = vst.msk [vmem:[#allocation2 + $0x8] sm:$0xff] %vm262, %v674
      %691 = vst.msk [vmem:[#allocation2 + $0x10] sm:$0xff] %vm262, %v675
      %692 = vst.msk [vmem:[#allocation2 + $0x18] sm:$0xff] %vm262, %v676
      %693 = vst.msk [vmem:[#allocation2 + $0x20] sm:$0xff] %vm262, %v677
      %694 = vst.msk [vmem:[#allocation2 + $0x28] sm:$0xff] %vm262, %v678
      %695 = vst.msk [vmem:[#allocation2 + $0x30] sm:$0xff] %vm262, %v679
      %696 = vst.msk [vmem:[#allocation2 + $0x38] sm:$0xff] %vm262, %v680
      %697 = vst.msk [vmem:[#allocation2 + $0x40] sm:$0xff] %vm262, %v681
      %698 = vst.msk [vmem:[#allocation2 + $0x48] sm:$0xff] %vm262, %v682
      %699 = vst.msk [vmem:[#allocation2 + $0x50] sm:$0xff] %vm262, %v683
      %700 = vst.msk [vmem:[#allocation2 + $0x58] sm:$0xff] %vm262, %v684
      %701 = vst.msk [vmem:[#allocation2 + $0x60] sm:$0xff] %vm262, %v685
      %702 = vst.msk [vmem:[#allocation2 + $0x68] sm:$0xff] %vm262, %v686
      %703 = vst.msk [vmem:[#allocation2 + $0x70] sm:$0xff] %vm262, %v687
      %704 = vst.msk [vmem:[#allocation2 + $0x78] sm:$0xff] %vm262, %v688
      %705 = vst.msk [vmem:[%s197] sm:$0xff] %vm262, %v673
      %706 = vst.msk [vmem:[%s197 + $0x8] sm:$0xff] %vm262, %v674
      %707 = vst.msk [vmem:[%s197 + $0x10] sm:$0xff] %vm262, %v675
      %708 = vst.msk [vmem:[%s197 + $0x18] sm:$0xff] %vm262, %v676
      %709 = vst.msk [vmem:[%s197 + $0x20] sm:$0xff] %vm262, %v677
      %710 = vst.msk [vmem:[%s197 + $0x28] sm:$0xff] %vm262, %v678
      %711 = vst.msk [vmem:[%s197 + $0x30] sm:$0xff] %vm262, %v679
      %712 = vst.msk [vmem:[%s197 + $0x38] sm:$0xff] %vm262, %v680
      %713 = vst.msk [vmem:[%s197 + $0x40] sm:$0xff] %vm262, %v681
      %714 = vst.msk [vmem:[%s197 + $0x48] sm:$0xff] %vm262, %v682
      %715 = vst.msk [vmem:[%s197 + $0x50] sm:$0xff] %vm262, %v683
      %716 = vst.msk [vmem:[%s197 + $0x58] sm:$0xff] %vm262, %v684
      %717 = vst.msk [vmem:[%s197 + $0x60] sm:$0xff] %vm262, %v685
      %718 = vst.msk [vmem:[%s197 + $0x68] sm:$0xff] %vm262, %v686
      %719 = vst.msk [vmem:[%s197 + $0x70] sm:$0xff] %vm262, %v687
      %720 = vst.msk [vmem:[%s197 + $0x78] sm:$0xff] %vm262, %v688
      %p721 = scmp.lt.s32.totalorder %s15, 3
      %s722 = scalar_select %p721, %s15, 3
      %s723 = smul.addr %s722, 16
      %s724 = smul.addr %s723, 8
      %s725 = scalar_lea.vmem %s4, %s724
      // Predicated region
      $region41: #{vgg_gru_forward.4} parent=35 // pred_check
        %p726 = pneg %p122
      $region42: #{vgg_gru_forward.4} parent=35 // pred_check_branch
        %728 = sbr.rel (%p726) target = $region44
      $region43: #{vgg_gru_forward.4} parent=35 // pred_region
        _
      $region44: #{vgg_gru_forward.4} parent=35 // pred_fallthru
        _
    $region36: #{vgg_gru_forward.4} parent=5 // pred_fallthru
      _
    %p729 = scmp.le.s32.totalorder 2, %s10
    // Predicated region
    $region45: #{vgg_gru_forward.4} parent=5 // pred_check
      %p730 = pneg %p729
    $region46: #{vgg_gru_forward.4} parent=5 // pred_check_branch
      %732 = sbr.rel (%p730) target = $region48
    $region47: #{vgg_gru_forward.4} parent=5 // pred_region
      %s733 = ssub.s32 %s10, 2
      // Predicated region
      $region49: #{vgg_gru_forward.4} parent=47 // pred_check
        %p734 = pneg %p128
      $region50: #{vgg_gru_forward.4} parent=47 // pred_check_branch
        %736 = sbr.rel (%p734) target = $region52
      $region51: #{vgg_gru_forward.4} parent=47 // pred_region
        %p737 = scmp.lt.s32.totalorder %s16, 3
        %s738 = scalar_select %p737, %s16, 3
        %s739 = smul.addr %s738, 16
        %s740 = smul.addr %s739, 8
        %s741 = scalar_lea.vmem %s4, %s740
      $region52: #{vgg_gru_forward.4} parent=47 // pred_fallthru
        _
    $region48: #{vgg_gru_forward.4} parent=5 // pred_fallthru
      _
  $region6: #{vgg_gru_forward.4} parent=0 // loop_footer
    %s14 = sadd.s32 1, %s10
  $region7: #{vgg_gru_forward.4} parent=0 // loop_footer_branch
    %9 = sbr.rel target = $region3
  $region8: #{vgg_gru_forward.4} parent=0 // loop_exit
    _

// kernel: vgg_gru_forward.5
$region0: #{vgg_gru_forward.5}
  #allocation0 [shape = 'u32[]', space=smem, size = 0x4, offset = 0x4, fixed_abs, tag = 'smem constant byte address 0x4 - core index']
  #allocation1 [shape = 'u32[144,128]{1,0:T(1,128)}', space=vmem, size = 0x12000, scoped, tag = 'internal scratch']
  %s0 = inlined_call_operand.vmem [shape: f32[4,2,256], index: 0, kind: input, shape index: {}]
  %s1 = inlined_call_operand.vmem [shape: f32[4,2,256], index: 1, kind: input, shape index: {}]
  %s2 = inlined_call_operand.vmem [shape: f32[4,2,256], index: 2, kind: input, shape index: {}]
  %s3 = inlined_call_operand.vmem [shape: f32[4,2,256], index: 3, kind: input, shape index: {}]
  %s4 = inlined_call_operand.vmem [shape: f32[256,64], index: 4, kind: input, shape index: {}]
  %s5 = inlined_call_operand.vmem [shape: f32[1,64], index: 5, kind: input, shape index: {}]
  %s6 = inlined_call_operand.vmem [shape: f32[64,64], index: 6, kind: input, shape index: {}]
  %s7 = inlined_call_operand.vmem [shape: f32[1,64], index: 7, kind: input, shape index: {}]
  %s8 = inlined_call_operand.vmem [shape: f32[64,10], index: 8, kind: input, shape index: {}]
  %s9 = inlined_call_operand.vmem [shape: f32[1,10], index: 9, kind: input, shape index: {}]
  %s10 = inlined_call_operand.hbm [shape: f32[2,10], index: 10, kind: output, shape index: {}]
  %s11 = sld [smem:[#allocation0]]
  $region50: #{vgg_gru_forward.5} parent=0
    _
  %s13 = ssub.s32 1, %s11
  %s14 = scalar_select 0, %s13, %s11
  $region1: #{vgg_gru_forward.5} parent=0
    #allocation2 [shape = 'u8[1024]{0}', space=vmem, size = 0x400, scoped, tag = 'output window, operand 0, single buffered']
    #allocation3 [shape = 's32[1]{0}', space=sflag, size = 0x4, scoped, tag = 'scoped memory for vgg_gru_forward.5']
    %15 = vsyncpa [#allocation3], 0
    // Predicated region
    $region2: #{vgg_gru_forward.5} parent=1 // pred_check
      _
    $region3: #{vgg_gru_forward.5} parent=1 // pred_check_branch
      %17 = sbr.rel (0) target = $region5
    $region4: #{vgg_gru_forward.5} parent=1 // pred_region
      _
    $region5: #{vgg_gru_forward.5} parent=1 // pred_fallthru
      _
    // Predicated region
    $region6: #{vgg_gru_forward.5} parent=1 // pred_check
      _
    $region7: #{vgg_gru_forward.5} parent=1 // pred_check_branch
      %19 = sbr.rel (0) target = $region9
    $region8: #{vgg_gru_forward.5} parent=1 // pred_region
      _
    $region9: #{vgg_gru_forward.5} parent=1 // pred_fallthru
      _
    // Predicated region
    $region10: #{vgg_gru_forward.5} parent=1 // pred_check
      _
    $region11: #{vgg_gru_forward.5} parent=1 // pred_check_branch
      %21 = sbr.rel (0) target = $region13
    $region12: #{vgg_gru_forward.5} parent=1 // pred_region
      _
    $region13: #{vgg_gru_forward.5} parent=1 // pred_fallthru
      _
    // Predicated region
    $region14: #{vgg_gru_forward.5} parent=1 // pred_check
      _
    $region15: #{vgg_gru_forward.5} parent=1 // pred_check_branch
      %23 = sbr.rel (0) target = $region17
    $region16: #{vgg_gru_forward.5} parent=1 // pred_region
      _
    $region17: #{vgg_gru_forward.5} parent=1 // pred_fallthru
      _
    // Predicated region
    $region18: #{vgg_gru_forward.5} parent=1 // pred_check
      _
    $region19: #{vgg_gru_forward.5} parent=1 // pred_check_branch
      %25 = sbr.rel (0) target = $region21
    $region20: #{vgg_gru_forward.5} parent=1 // pred_region
      _
    $region21: #{vgg_gru_forward.5} parent=1 // pred_fallthru
      _
    // Predicated region
    $region22: #{vgg_gru_forward.5} parent=1 // pred_check
      _
    $region23: #{vgg_gru_forward.5} parent=1 // pred_check_branch
      %27 = sbr.rel (0) target = $region25
    $region24: #{vgg_gru_forward.5} parent=1 // pred_region
      _
    $region25: #{vgg_gru_forward.5} parent=1 // pred_fallthru
      _
    // Predicated region
    $region26: #{vgg_gru_forward.5} parent=1 // pred_check
      _
    $region27: #{vgg_gru_forward.5} parent=1 // pred_check_branch
      %29 = sbr.rel (0) target = $region29
    $region28: #{vgg_gru_forward.5} parent=1 // pred_region
      _
    $region29: #{vgg_gru_forward.5} parent=1 // pred_fallthru
      _
    // Predicated region
    $region30: #{vgg_gru_forward.5} parent=1 // pred_check
      _
    $region31: #{vgg_gru_forward.5} parent=1 // pred_check_branch
      %31 = sbr.rel (0) target = $region33
    $region32: #{vgg_gru_forward.5} parent=1 // pred_region
      _
    $region33: #{vgg_gru_forward.5} parent=1 // pred_fallthru
      _
    // Predicated region
    $region34: #{vgg_gru_forward.5} parent=1 // pred_check
      _
    $region35: #{vgg_gru_forward.5} parent=1 // pred_check_branch
      %33 = sbr.rel (0) target = $region37
    $region36: #{vgg_gru_forward.5} parent=1 // pred_region
      _
    $region37: #{vgg_gru_forward.5} parent=1 // pred_fallthru
      _
    // Predicated region
    $region38: #{vgg_gru_forward.5} parent=1 // pred_check
      _
    $region39: #{vgg_gru_forward.5} parent=1 // pred_check_branch
      %35 = sbr.rel (0) target = $region41
    $region40: #{vgg_gru_forward.5} parent=1 // pred_region
      _
    $region41: #{vgg_gru_forward.5} parent=1 // pred_fallthru
      _
    %v36 = vld [vmem:[%s0] sm:$0xf]
    %v37 = vld [vmem:[%s0 + $0x4] sm:$0xf]
    %v38 = vld [vmem:[%s0 + $0x8] sm:$0xf]
    %v39 = vld [vmem:[%s0 + $0xc] sm:$0xf]
    %v40 = vld [vmem:[%s1] sm:$0xf]
    %v41 = vld [vmem:[%s1 + $0x4] sm:$0xf]
    %v42 = vld [vmem:[%s1 + $0x8] sm:$0xf]
    %v43 = vld [vmem:[%s1 + $0xc] sm:$0xf]
    %v44 = vmax.f32 %v36, %v40
    %v45 = vmax.f32 %v37, %v41
    %v46 = vmax.f32 %v38, %v42
    %v47 = vmax.f32 %v39, %v43
    %v48 = vld [vmem:[%s2] sm:$0xf]
    %v49 = vld [vmem:[%s2 + $0x4] sm:$0xf]
    %v50 = vld [vmem:[%s2 + $0x8] sm:$0xf]
    %v51 = vld [vmem:[%s2 + $0xc] sm:$0xf]
    %v52 = vld [vmem:[%s3] sm:$0xf]
    %v53 = vld [vmem:[%s3 + $0x4] sm:$0xf]
    %v54 = vld [vmem:[%s3 + $0x8] sm:$0xf]
    %v55 = vld [vmem:[%s3 + $0xc] sm:$0xf]
    %v56 = vmax.f32 %v48, %v52
    %v57 = vmax.f32 %v49, %v53
    %v58 = vmax.f32 %v50, %v54
    %v59 = vmax.f32 %v51, %v55
    %v60 = vmax.f32 %v44, %v56
    %v61 = vmax.f32 %v45, %v57
    %v62 = vmax.f32 %v46, %v58
    %v63 = vmax.f32 %v47, %v59
    %v64 = vadd.f32 %v60, %v61
    %v65 = vadd.f32 %v64, %v62
    %v66 = vadd.f32 %v65, %v63
    %v67 = vmul.f32 %v66, 0.25
    %v68 = vld [vmem:[%s4] sm:$0xff]
    %v69 = vld [vmem:[%s4 + $0x8] sm:$0xff]
    %v70 = vld [vmem:[%s4 + $0x10] sm:$0xff]
    %v71 = vld [vmem:[%s4 + $0x18] sm:$0xff]
    %v72 = vld [vmem:[%s4 + $0x20] sm:$0xff]
    %v73 = vld [vmem:[%s4 + $0x28] sm:$0xff]
    %v74 = vld [vmem:[%s4 + $0x30] sm:$0xff]
    %v75 = vld [vmem:[%s4 + $0x38] sm:$0xff]
    %v76 = vld [vmem:[%s4 + $0x40] sm:$0xff]
    %v77 = vld [vmem:[%s4 + $0x48] sm:$0xff]
    %v78 = vld [vmem:[%s4 + $0x50] sm:$0xff]
    %v79 = vld [vmem:[%s4 + $0x58] sm:$0xff]
    %v80 = vld [vmem:[%s4 + $0x60] sm:$0xff]
    %v81 = vld [vmem:[%s4 + $0x68] sm:$0xff]
    %v82 = vld [vmem:[%s4 + $0x70] sm:$0xff]
    %v83 = vld [vmem:[%s4 + $0x78] sm:$0xff]
    %v84 = vld [vmem:[%s4 + $0x80] sm:$0xff]
    %v85 = vld [vmem:[%s4 + $0x88] sm:$0xff]
    %v86 = vld [vmem:[%s4 + $0x90] sm:$0xff]
    %v87 = vld [vmem:[%s4 + $0x98] sm:$0xff]
    %v88 = vld [vmem:[%s4 + $0xa0] sm:$0xff]
    %v89 = vld [vmem:[%s4 + $0xa8] sm:$0xff]
    %v90 = vld [vmem:[%s4 + $0xb0] sm:$0xff]
    %v91 = vld [vmem:[%s4 + $0xb8] sm:$0xff]
    %v92 = vld [vmem:[%s4 + $0xc0] sm:$0xff]
    %v93 = vld [vmem:[%s4 + $0xc8] sm:$0xff]
    %v94 = vld [vmem:[%s4 + $0xd0] sm:$0xff]
    %v95 = vld [vmem:[%s4 + $0xd8] sm:$0xff]
    %v96 = vld [vmem:[%s4 + $0xe0] sm:$0xff]
    %v97 = vld [vmem:[%s4 + $0xe8] sm:$0xff]
    %v98 = vld [vmem:[%s4 + $0xf0] sm:$0xff]
    %v99 = vld [vmem:[%s4 + $0xf8] sm:$0xff]
    %v100 = vld [vmem:[%s5] sm:$0x1]
    %v102 = vlaneseq
    %v103 = vshrl.u32 %v102, 7
    %v104 = vsub.s32 0, %v103
    %v105 = vrot.slane %v100, %v104
    %v109 = vunpack.c.l.s4 1983009808
    %v110 = vunpack.c.0.s8 %v109
    %v111 = vlaneseq
    %v112 = vshrl.u32 %v111, 7
    %v113 = vsub.s32 %v110, %v112
    %v114 = vrot.slane %v67, %v113
    %v115 = vcombine.high %v114, %v114
    %118 = vmatprep.subr.mxu0 0.0
    %119 = vmatpush1.msra.mxu0 %v68
    %120 = vmatprep.subr.mxu0 0.0
    %121 = vmatpush1.msra.mxu0 %v69
    %122 = vmatprep.subr.mxu0 0.0
    %123 = vmatpush1.msra.mxu0 %v70
    %124 = vmatprep.subr.mxu0 0.0
    %125 = vmatpush1.msra.mxu0 %v71
    %126 = vmatprep.subr.mxu0 0.0
    %127 = vmatpush1.msra.mxu0 %v72
    %128 = vmatprep.subr.mxu0 0.0
    %129 = vmatpush1.msra.mxu0 %v73
    %130 = vmatprep.subr.mxu0 0.0
    %131 = vmatpush1.msra.mxu0 %v74
    %132 = vmatprep.subr.mxu0 0.0
    %133 = vmatpush1.msra.mxu0 %v75
    %134 = vmatprep.subr.mxu0 0.0
    %135 = vmatpush1.msra.mxu0 %v76
    %136 = vmatprep.subr.mxu0 0.0
    %137 = vmatpush1.msra.mxu0 %v77
    %138 = vmatprep.subr.mxu0 0.0
    %139 = vmatpush1.msra.mxu0 %v78
    %140 = vmatprep.subr.mxu0 0.0
    %141 = vmatpush1.msra.mxu0 %v79
    %142 = vmatprep.subr.mxu0 0.0
    %143 = vmatpush1.msra.mxu0 %v80
    %144 = vmatprep.subr.mxu0 0.0
    %145 = vmatpush1.msra.mxu0 %v81
    %146 = vmatprep.subr.mxu0 0.0
    %147 = vmatpush1.msra.mxu0 %v82
    %148 = vmatprep.subr.mxu0 0.0
    %149 = vmatpush1.msra.mxu0 %v83
    %150 = vmatprep.subr.mxu0 0.0
    %151 = vmatpush1.msra.mxu0 %v84
    %152 = vmatprep.subr.mxu0 0.0
    %153 = vmatpush1.msra.mxu0 %v85
    %154 = vmatprep.subr.mxu0 0.0
    %155 = vmatpush1.msra.mxu0 %v86
    %156 = vmatprep.subr.mxu0 0.0
    %157 = vmatpush1.msra.mxu0 %v87
    %158 = vmatprep.subr.mxu0 0.0
    %159 = vmatpush1.msra.mxu0 %v88
    %160 = vmatprep.subr.mxu0 0.0
    %161 = vmatpush1.msra.mxu0 %v89
    %162 = vmatprep.subr.mxu0 0.0
    %163 = vmatpush1.msra.mxu0 %v90
    %164 = vmatprep.subr.mxu0 0.0
    %165 = vmatpush1.msra.mxu0 %v91
    %166 = vmatprep.subr.mxu0 0.0
    %167 = vmatpush1.msra.mxu0 %v92
    %168 = vmatprep.subr.mxu0 0.0
    %169 = vmatpush1.msra.mxu0 %v93
    %170 = vmatprep.subr.mxu0 0.0
    %171 = vmatpush1.msra.mxu0 %v94
    %172 = vmatprep.subr.mxu0 0.0
    %173 = vmatpush1.msra.mxu0 %v95
    %174 = vmatprep.subr.mxu0 0.0
    %175 = vmatpush1.msra.mxu0 %v96
    %176 = vmatprep.subr.mxu0 0.0
    %177 = vmatpush1.msra.mxu0 %v97
    %178 = vmatprep.subr.mxu0 0.0
    %179 = vmatpush1.msra.mxu0 %v98
    %180 = vmatprep.subr.mxu0 0.0
    %181 = vmatpush1.msra.mxu0 %v99
    %182 = vmatprep.mubr.f32.mxu0 %v115
    %183 = vmatmul.mubr.f32.gmra.mrb[0].mxu0 %v114
    %v184 = vpop.f32.mrb[0].mxu0
    %v185 = vadd.f32 %v105, %v184
    %v186 = vpop.f32.mrb[0].mxu0
    %187 = vdwg.mxu0
    %v188 = vmax.f32 %v185, 0.0
    %v189 = vld [vmem:[%s6] sm:$0xff]
    %v190 = vld [vmem:[%s6 + $0x8] sm:$0xff]
    %v191 = vld [vmem:[%s6 + $0x10] sm:$0xff]
    %v192 = vld [vmem:[%s6 + $0x18] sm:$0xff]
    %v193 = vld [vmem:[%s6 + $0x20] sm:$0xff]
    %v194 = vld [vmem:[%s6 + $0x28] sm:$0xff]
    %v195 = vld [vmem:[%s6 + $0x30] sm:$0xff]
    %v196 = vld [vmem:[%s6 + $0x38] sm:$0xff]
    %v197 = vld [vmem:[%s7] sm:$0x1]
    %v199 = vlaneseq
    %v200 = vshrl.u32 %v199, 7
    %v201 = vsub.s32 0, %v200
    %v202 = vrot.slane %v197, %v201
    %vm204 = vcmask 523264
    %v206 = vsel %vm204, %v188, 0
    %208 = vmatprep.subr.mxu0 0.0
    %209 = vmatpush1.msra.mxu0 %v189
    %210 = vmatprep.subr.mxu0 0.0
    %211 = vmatpush1.msra.mxu0 %v190
    %212 = vmatprep.subr.mxu0 0.0
    %213 = vmatpush1.msra.mxu0 %v191
    %214 = vmatprep.subr.mxu0 0.0
    %215 = vmatpush1.msra.mxu0 %v192
    %216 = vmatprep.subr.mxu0 0.0
    %217 = vmatpush1.msra.mxu0 %v193
    %218 = vmatprep.subr.mxu0 0.0
    %219 = vmatpush1.msra.mxu0 %v194
    %220 = vmatprep.subr.mxu0 0.0
    %221 = vmatpush1.msra.mxu0 %v195
    %222 = vmatprep.subr.mxu0 0.0
    %223 = vmatpush1.msra.mxu0 %v196
    %224 = vmatprep.subr.mxu0 0.0
    %225 = vmatpush1.msra.mxu0 0.0
    %226 = vmatprep.subr.mxu0 0.0
    %227 = vmatpush1.msra.mxu0 0.0
    %228 = vmatprep.subr.mxu0 0.0
    %229 = vmatpush1.msra.mxu0 0.0
    %230 = vmatprep.subr.mxu0 0.0
    %231 = vmatpush1.msra.mxu0 0.0
    %232 = vmatprep.subr.mxu0 0.0
    %233 = vmatpush1.msra.mxu0 0.0
    %234 = vmatprep.subr.mxu0 0.0
    %235 = vmatpush1.msra.mxu0 0.0
    %236 = vmatprep.subr.mxu0 0.0
    %237 = vmatpush1.msra.mxu0 0.0
    %238 = vmatprep.subr.mxu0 0.0
    %239 = vmatpush1.msra.mxu0 0.0
    %240 = vmatprep.subr.mxu0 0.0
    %241 = vmatpush1.msra.mxu0 0.0
    %242 = vmatprep.subr.mxu0 0.0
    %243 = vmatpush1.msra.mxu0 0.0
    %244 = vmatprep.subr.mxu0 0.0
    %245 = vmatpush1.msra.mxu0 0.0
    %246 = vmatprep.subr.mxu0 0.0
    %247 = vmatpush1.msra.mxu0 0.0
    %248 = vmatprep.subr.mxu0 0.0
    %249 = vmatpush1.msra.mxu0 0.0
    %250 = vmatprep.subr.mxu0 0.0
    %251 = vmatpush1.msra.mxu0 0.0
    %252 = vmatprep.subr.mxu0 0.0
    %253 = vmatpush1.msra.mxu0 0.0
    %254 = vmatprep.subr.mxu0 0.0
    %255 = vmatpush1.msra.mxu0 0.0
    %256 = vmatprep.subr.mxu0 0.0
    %257 = vmatpush1.msra.mxu0 0.0
    %258 = vmatprep.subr.mxu0 0.0
    %259 = vmatpush1.msra.mxu0 0.0
    %260 = vmatprep.subr.mxu0 0.0
    %261 = vmatpush1.msra.mxu0 0.0
    %262 = vmatprep.subr.mxu0 0.0
    %263 = vmatpush1.msra.mxu0 0.0
    %264 = vmatprep.subr.mxu0 0.0
    %265 = vmatpush1.msra.mxu0 0.0
    %266 = vmatprep.subr.mxu0 0.0
    %267 = vmatpush1.msra.mxu0 0.0
    %268 = vmatprep.subr.mxu0 0.0
    %269 = vmatpush1.msra.mxu0 0.0
    %270 = vmatprep.subr.mxu0 0.0
    %271 = vmatpush1.msra.mxu0 0.0
    %272 = vmatprep.mubr.f32.mxu0 0.0
    %273 = vmatmul.mubr.f32.gmra.mrb[0].mxu0 %v206
    %v274 = vpop.f32.mrb[0].mxu0
    %v275 = vadd.f32 %v202, %v274
    %v276 = vpop.f32.mrb[0].mxu0
    %277 = vdwg.mxu0
    %v278 = vmax.f32 %v275, 0.0
    %v279 = vld [vmem:[%s8] sm:$0xff]
    %v280 = vld [vmem:[%s8 + $0x8] sm:$0xff]
    %v281 = vld [vmem:[%s8 + $0x10] sm:$0xff]
    %v282 = vld [vmem:[%s8 + $0x18] sm:$0xff]
    %v283 = vld [vmem:[%s8 + $0x20] sm:$0xff]
    %v284 = vld [vmem:[%s8 + $0x28] sm:$0xff]
    %v285 = vld [vmem:[%s8 + $0x30] sm:$0xff]
    %v286 = vld [vmem:[%s8 + $0x38] sm:$0xff]
    %v287 = vld [vmem:[%s9] sm:$0x1]
    %v289 = vlaneseq
    %v290 = vshrl.u32 %v289, 7
    %v291 = vsub.s32 0, %v290
    %v292 = vrot.slane %v287, %v291
    %v295 = vsel %vm204, %v278, 0
    %297 = vmatprep.subr.mxu0 0.0
    %298 = vmatpush1.msra.mxu0 %v279
    %299 = vmatprep.subr.mxu0 0.0
    %300 = vmatpush1.msra.mxu0 %v280
    %301 = vmatprep.subr.mxu0 0.0
    %302 = vmatpush1.msra.mxu0 %v281
    %303 = vmatprep.subr.mxu0 0.0
    %304 = vmatpush1.msra.mxu0 %v282
    %305 = vmatprep.subr.mxu0 0.0
    %306 = vmatpush1.msra.mxu0 %v283
    %307 = vmatprep.subr.mxu0 0.0
    %308 = vmatpush1.msra.mxu0 %v284
    %309 = vmatprep.subr.mxu0 0.0
    %310 = vmatpush1.msra.mxu0 %v285
    %311 = vmatprep.subr.mxu0 0.0
    %312 = vmatpush1.msra.mxu0 %v286
    %313 = vmatprep.subr.mxu0 0.0
    %314 = vmatpush1.msra.mxu0 0.0
    %315 = vmatprep.subr.mxu0 0.0
    %316 = vmatpush1.msra.mxu0 0.0
    %317 = vmatprep.subr.mxu0 0.0
    %318 = vmatpush1.msra.mxu0 0.0
    %319 = vmatprep.subr.mxu0 0.0
    %320 = vmatpush1.msra.mxu0 0.0
    %321 = vmatprep.subr.mxu0 0.0
    %322 = vmatpush1.msra.mxu0 0.0
    %323 = vmatprep.subr.mxu0 0.0
    %324 = vmatpush1.msra.mxu0 0.0
    %325 = vmatprep.subr.mxu0 0.0
    %326 = vmatpush1.msra.mxu0 0.0
    %327 = vmatprep.subr.mxu0 0.0
    %328 = vmatpush1.msra.mxu0 0.0
    %329 = vmatprep.subr.mxu0 0.0
    %330 = vmatpush1.msra.mxu0 0.0
    %331 = vmatprep.subr.mxu0 0.0
    %332 = vmatpush1.msra.mxu0 0.0
    %333 = vmatprep.subr.mxu0 0.0
    %334 = vmatpush1.msra.mxu0 0.0
    %335 = vmatprep.subr.mxu0 0.0
    %336 = vmatpush1.msra.mxu0 0.0
    %337 = vmatprep.subr.mxu0 0.0
    %338 = vmatpush1.msra.mxu0 0.0
    %339 = vmatprep.subr.mxu0 0.0
    %340 = vmatpush1.msra.mxu0 0.0
    %341 = vmatprep.subr.mxu0 0.0
    %342 = vmatpush1.msra.mxu0 0.0
    %343 = vmatprep.subr.mxu0 0.0
    %344 = vmatpush1.msra.mxu0 0.0
    %345 = vmatprep.subr.mxu0 0.0
    %346 = vmatpush1.msra.mxu0 0.0
    %347 = vmatprep.subr.mxu0 0.0
    %348 = vmatpush1.msra.mxu0 0.0
    %349 = vmatprep.subr.mxu0 0.0
    %350 = vmatpush1.msra.mxu0 0.0
    %351 = vmatprep.subr.mxu0 0.0
    %352 = vmatpush1.msra.mxu0 0.0
    %353 = vmatprep.subr.mxu0 0.0
    %354 = vmatpush1.msra.mxu0 0.0
    %355 = vmatprep.subr.mxu0 0.0
    %356 = vmatpush1.msra.mxu0 0.0
    %357 = vmatprep.subr.mxu0 0.0
    %358 = vmatpush1.msra.mxu0 0.0
    %359 = vmatprep.subr.mxu0 0.0
    %360 = vmatpush1.msra.mxu0 0.0
    %361 = vmatprep.mubr.f32.mxu0 0.0
    %362 = vmatmul.mubr.f32.gmra.mrb[0].mxu0 %v295
    %v363 = vpop.f32.mrb[0].mxu0
    %v364 = vadd.f32 %v292, %v363
    %v365 = vpop.f32.mrb[0].mxu0
    %366 = vdwg.mxu0
    %vm367 = vcmask 74752
    %368 = vst.msk [vmem:[#allocation2] sm:$0x3] %vm367, %v364
    // Predicated region
    $region42: #{vgg_gru_forward.5} parent=1 // pred_check
      _
    $region43: #{vgg_gru_forward.5} parent=1 // pred_check_branch
      %370 = sbr.rel (0) target = $region45
    $region44: #{vgg_gru_forward.5} parent=1 // pred_region
      %s372 = ssub.s32 32, 32
      %373 = vsyncadd [#allocation3], %s372
      %s375 = sshll.u32 [#allocation2], 4
      %s376 = int_to_ptr.vmem [resolvable:$true] %s375
      %378 = dma.vmem_to_hbm [thread:$0]  %s376, 32, %s10, [#allocation3]
    $region45: #{vgg_gru_forward.5} parent=1 // pred_fallthru
      _
    // Predicated region
    $region46: #{vgg_gru_forward.5} parent=1 // pred_check
      _
    $region47: #{vgg_gru_forward.5} parent=1 // pred_check_branch
      %380 = sbr.rel (0) target = $region49
    $region48: #{vgg_gru_forward.5} parent=1 // pred_region
      %381 = dma.done [#allocation3], 32
    $region49: #{vgg_gru_forward.5} parent=1 // pred_fallthru
      _
    %382 = vsyncpa [#allocation3], 1

</llo_original>
